<compile_context>
chip_gen: v7x
topology: tpu7x:2x2x1
jax: 0.10.0
libtpu: 0.0.40
codegen_flags: <defaults>
</compile_context>

<pallas_src>
import jax
import jax.numpy as jnp
from jax import lax
from jax.experimental import pallas as pl
from jax.experimental.pallas import tpu as pltpu

NODE_RAW = 3     # raw node feature dim
ACT_DIM = 1      # action dim concatenated on
NODE_IN = NODE_RAW + ACT_DIM   # 4
EDGE_IN = 1
HID = 10         # gconv1 node_out / edge_out
NODE_OUT = 2     # n2n3 / e2n3 node_out


def critic_kernel(A_ref, B_ref, Vc_ref, E_ref,
                  Wn2n1_ref, We2n1_ref, b1n_ref,
                  Wn2e1_ref, We2e1_ref, b1e_ref,
                  Wn2n3_ref, We2n3_ref,
                  out_ref):
    """One grid step: `tb` batch elements -> one scalar partial sum."""
    f32 = jnp.float32
    tb, n, _ = A_ref.shape
    m = B_ref.shape[2]

    # Upcast once in VMEM; HBM traffic stays in the (possibly bf16) storage dtype.
    A = A_ref[...].astype(f32)     # (tb, n, n)
    Bm = B_ref[...].astype(f32)    # (tb, n, m)
    Vc = Vc_ref[...]               # (tb, n, NODE_IN) f32
    E = E_ref[...]                 # (tb, m, EDGE_IN) f32

    # Batched matmul: contract lhs dim 2 with rhs dim 1, batch dim 0.
    bmm = lambda x, y: lax.dot_general(
        x, y, (((2,), (1,)), ((0,), (0,))), preferred_element_type=f32)

    def project(x3, w_ref):
        """(tb, r, K) @ (K, H): flatten leading dims into MXU rows when aligned."""
        r, k = x3.shape[1], x3.shape[2]
        w = w_ref[...]
        if r % 8 == 0:  # sublane-aligned -> free reshape, one well-filled matmul
            y = jnp.dot(x3.reshape(tb * r, k), w, preferred_element_type=f32)
            return y.reshape(tb, r, w.shape[1])
        return jnp.einsum('brk,kh->brh', x3, w, preferred_element_type=f32)

    # ---- gconv1 node branch: relu((A@Vc)@Wn2n1 + (Bm@E)*We2n1 + b1n) ----------
    # (the EDGE_IN=1 contraction is a broadcast multiply on the VPU, no concat)
    AV = bmm(A, Vc)                                      # (tb, n, 4)
    BE = bmm(Bm, E)                                      # (tb, n, 1)
    Vh = jnp.maximum(
        project(AV, Wn2n1_ref) + BE * We2n1_ref[...] + b1n_ref[...], 0.0)   # (tb, n, 10)

    # ---- gconv1 edge branch: relu((B^T@Vc)@Wn2e1 + E*We2e1 + b1e) -------------
    BtV = lax.dot_general(Bm, Vc, (((1,), (1,)), ((0,), (0,))),
                          preferred_element_type=f32)    # (tb, m, 4)
    Eh = jnp.maximum(
        project(BtV, Wn2e1_ref) + E * We2e1_ref[...] + b1e_ref[...], 0.0)   # (tb, m, 10)

    # ---- layer 3 (bias b3 applied in the wrapper): (A@Vh)@Wn2n3 + (Bm@Eh)@We2n3
    AVh = bmm(A, Vh)                                     # (tb, n, 10)
    BEh = bmm(Bm, Eh)                                    # (tb, n, 10)
    Vout = project(AVh, Wn2n3_ref) + project(BEh, We2n3_ref)                # (tb, n, 2)

    # Zero-padded batch elements have A == Bm == 0 => AVh == BEh == 0, so the
    # partial sum needs no masking (the only bias-leak source, b3, lives outside).
    out_ref[...] = jnp.reshape(jnp.sum(Vout), (1, 1, 1))


def _padded_vmem_bytes(shape, dtype):
    """VMEM bytes of one per-element block: last two dims pad to (sublane, 128)."""
    itemsize = jnp.dtype(dtype).itemsize
    sub = 8 * (4 // itemsize)                 # 8 (f32), 16 (bf16), 32 (int8)
    rows = shape[-2] if len(shape) >= 2 else 1
    cols = shape[-1]
    lead = 1
    for s in shape[:-2]:
        lead *= int(s)
    rp = -(-rows // sub) * sub
    cp = -(-cols // 128) * 128
    return lead * rp * cp * itemsize


def critic_forward(A, Bm, V, E, a, params, *, tb=None, graph_dtype=jnp.bfloat16):
    """Pallas-backed Critic forward. Returns a scalar (sum over all node outputs)."""
    bsz, n, _ = A.shape
    m = Bm.shape[2]
    (Wn2n1, bn2n1, We2n1, be2n1, Wn2e1, bn2e1, We2e1, be2e1,
     Wn2n3, bn2n3, We2n3, be2n3) = params

    # Fused biases (valid because the paired linears are summed, not concatenated).
    b1n = bn2n1 + be2n1                       # (1, HID)
    b1e = bn2e1 + be2e1                       # (1, HID)
    b3_sum = jnp.sum(bn2n3 + be2n3)           # layer-3 bias handled analytically

    Vc = jnp.concatenate([V, a], axis=-1).astype(jnp.float32)   # (bsz, n, 4)
    A = A.astype(graph_dtype)                 # A/Bm dominate HBM bytes
    Bm = Bm.astype(graph_dtype)
    E = E.astype(jnp.float32)

    # ---- tb sizing against the PADDED (8,128)-tile VMEM footprint --------------
    in_per_elem = (_padded_vmem_bytes((n, n), graph_dtype)
                   + _padded_vmem_bytes((n, m), graph_dtype)
                   + _padded_vmem_bytes((n, NODE_IN), jnp.float32)
                   + _padded_vmem_bytes((m, EDGE_IN), jnp.float32))
    interm_shapes = [(n, n), (n, m),                        # f32 upcasts of A, Bm
                     (n, NODE_IN), (n, EDGE_IN),            # AV, BE
                     (n, HID), (n, HID),                    # node pre-act, Vh
                     (m, NODE_IN), (m, HID), (m, HID),      # BtV, edge pre-act, Eh
                     (n, HID), (n, HID), (n, NODE_OUT)]     # AVh, BEh, Vout
    interm_per_elem = sum(_padded_vmem_bytes(s, jnp.float32) for s in interm_shapes)
    per_elem = 2 * in_per_elem + interm_per_elem            # inputs double-buffered

    try:
        vmem_cap = int(pltpu.get_tpu_info().vmem_capacity_bytes)
    except Exception:
        vmem_cap = 64 * 1024 * 1024          # v7x per-core VMEM (smallest generation)
    vmem_limit = min(int(0.75 * vmem_cap), 100 * 1024 * 1024)  # ~48 MiB v7x, ~96 MiB v5e/v6e
    budget = int(0.8 * vmem_limit)           # headroom for weights / regalloc / sems

    if tb is None:
        tb = budget // max(per_elem, 1)
    tb = int(max(1, min(tb, bsz, 1024)))
    # Keep >= min(bsz, 4) grid blocks so v7x's second TensorCore is not idle.
    min_blocks = max(1, min(bsz, 4))
    tb = max(1, min(tb, -(-bsz // min_blocks)))

    pad = (-bsz) % tb
    if pad:
        zpad = lambda x: jnp.pad(x, ((0, pad),) + ((0, 0),) * (x.ndim - 1))
        A, Bm, Vc, E = zpad(A), zpad(Bm), zpad(Vc), zpad(E)
    num_blocks = (bsz + pad) // tb

    def batched(shape):
        return pl.BlockSpec((tb,) + shape, lambda b: (b, 0, 0))

    def full2d(w):
        return pl.BlockSpec(w.shape, lambda b: (0, 0))

    # Advisory cost estimate for the XLA scheduler.
    flops_per_b = 2 * (n * n * NODE_IN + n * m * EDGE_IN + m * n * NODE_IN
                       + n * NODE_IN * HID + m * NODE_IN * HID
                       + n * n * HID + n * m * HID + 2 * n * HID * NODE_OUT)
    g_item = jnp.dtype(graph_dtype).itemsize
    bytes_accessed = (bsz * (g_item * (n * n + n * m)
                             + 4 * (n * NODE_IN + m * EDGE_IN))
                      + 4 * (2 * NODE_IN * HID + 4 * HID + 2 * HID * NODE_OUT)
                      + 4 * num_blocks)

    out = pl.pallas_call(
        critic_kernel,
        out_shape=jax.ShapeDtypeStruct((num_blocks, 1, 1), jnp.float32),
        grid=(num_blocks,),
        in_specs=[
            batched((n, n)),          # A
            batched((n, m)),          # Bm
            batched((n, NODE_IN)),    # Vc = [V | a]
            batched((m, EDGE_IN)),    # E
            full2d(Wn2n1), full2d(We2n1), full2d(b1n),
            full2d(Wn2e1), full2d(We2e1), full2d(b1e),
            full2d(Wn2n3), full2d(We2n3),
        ],
        out_specs=pl.BlockSpec((1, 1, 1), lambda b: (b, 0, 0)),
        compiler_params=pltpu.CompilerParams(
            dimension_semantics=("parallel",),     # independent partial sums
            vmem_limit_bytes=vmem_limit),
        cost_estimate=pl.CostEstimate(
            flops=flops_per_b * bsz,
            transcendentals=0,
            bytes_accessed=bytes_accessed),
    )(A, Bm, Vc, E, Wn2n1, We2n1, b1n, Wn2e1, We2e1, b1e, Wn2n3, We2n3)

    # Layer-3 bias contributes exactly bsz * n * sum(bn2n3 + be2n3) to the sum.
    return jnp.sum(out) + float(bsz * n) * b3_sum


def critic_reference(A, Bm, V, E, a, params):
    """Pure-JAX reference (unfused weights, f32) for correctness checking."""
    (Wn2n1, bn2n1, We2n1, be2n1, Wn2e1, bn2e1, We2e1, be2e1,
     Wn2n3, bn2n3, We2n3, be2n3) = params
    Vc = jnp.concatenate([V, a], axis=-1)
    Bt = jnp.swapaxes(Bm, 1, 2)
    bmm = lambda x, y: jnp.einsum('bij,bjk->bik', x, y)
    Vh = jax.nn.relu(bmm(A, Vc) @ Wn2n1 + bn2n1 + bmm(Bm, E) @ We2n1 + be2n1)
    Eh = jax.nn.relu(bmm(Bt, Vc) @ Wn2e1 + bn2e1 + E @ We2e1 + be2e1)
    Vout = bmm(A, Vh) @ Wn2n3 + bn2n3 + bmm(Bm, Eh) @ We2n3 + be2n3
    return jnp.sum(Vout)


def init_params(key):
    """Deterministic Linear-style init (uniform +-1/sqrt(fan_in)), PyTorch default."""
    def lin(k, fin, fout):
        kw, kb = jax.random.split(k)
        lim = 1.0 / float(fin) ** 0.5
        W = jax.random.uniform(kw, (fin, fout), jnp.float32, -lim, lim)
        b = jax.random.uniform(kb, (1, fout), jnp.float32, -lim, lim)
        return W, b

    keys = jax.random.split(key, 6)
    Wn2n1, bn2n1 = lin(keys[0], NODE_IN, HID)     # gconv1 NodeToNode
    We2n1, be2n1 = lin(keys[1], EDGE_IN, HID)     # gconv1 EdgeToNode
    Wn2e1, bn2e1 = lin(keys[2], NODE_IN, HID)     # gconv1 NodeToEdge
    We2e1, be2e1 = lin(keys[3], EDGE_IN, HID)     # gconv1 EdgeToEdge
    Wn2n3, bn2n3 = lin(keys[4], HID, NODE_OUT)    # n2n3
    We2n3, be2n3 = lin(keys[5], HID, NODE_OUT)    # e2n3
    return [Wn2n1, bn2n1, We2n1, be2n1, Wn2e1, bn2e1, We2e1, be2e1,
            Wn2n3, bn2n3, We2n3, be2n3]


if __name__ == "__main__":
    key = jax.random.PRNGKey(0)
    k_a, k_b, k_v, k_e, k_act, k_p = jax.random.split(key, 6)

    batch, n, m = 2, 8, 16
    A = jax.random.uniform(k_a, (batch, n, n), jnp.float32)      # adjacency
    Bm = jax.random.uniform(k_b, (batch, n, m), jnp.float32)     # incidence
    V = jax.random.normal(k_v, (batch, n, NODE_RAW), jnp.float32)
    E = jax.random.normal(k_e, (batch, m, EDGE_IN), jnp.float32)
    a = jax.random.normal(k_act, (batch, n, ACT_DIM), jnp.float32)

    params = init_params(k_p)
    ref = critic_reference(A, Bm, V, E, a, params)

    # Exact-math path (f32 graph tensors): tight check of the kernel algebra.
    out_f32 = jax.block_until_ready(
        critic_forward(A, Bm, V, E, a, params, graph_dtype=jnp.float32))
    assert jnp.allclose(out_f32, ref, rtol=1e-3, atol=1e-2), (out_f32, ref)

    # Default path (bf16 A/Bm to halve HBM traffic, f32 accumulation): looser tol.
    out_bf16 = jax.block_until_ready(critic_forward(A, Bm, V, E, a, params))
    assert jnp.allclose(out_bf16, ref, rtol=5e-2, atol=1.0), (out_bf16, ref)

    print("KERNEL_OK")
</pallas_src>

<mosaic_0001>
module attributes {stable_mosaic.version = 11 : i64} {
  func.func @critic_kernel(%arg0: i32, %arg1: memref<1x8x8xf32, #tpu.memory_space<vmem>>, %arg2: memref<1x8x16xf32, #tpu.memory_space<vmem>>, %arg3: memref<1x8x4xf32, #tpu.memory_space<vmem>>, %arg4: memref<1x16x1xf32, #tpu.memory_space<vmem>>, %arg5: memref<4x10xf32, #tpu.memory_space<vmem>>, %arg6: memref<1x10xf32, #tpu.memory_space<vmem>>, %arg7: memref<1x10xf32, #tpu.memory_space<vmem>>, %arg8: memref<4x10xf32, #tpu.memory_space<vmem>>, %arg9: memref<1x10xf32, #tpu.memory_space<vmem>>, %arg10: memref<1x10xf32, #tpu.memory_space<vmem>>, %arg11: memref<10x2xf32, #tpu.memory_space<vmem>>, %arg12: memref<10x2xf32, #tpu.memory_space<vmem>>, %arg13: memref<1x1x1xf32, #tpu.memory_space<vmem>>) attributes {dimension_semantics = [#tpu.dimension_semantics<parallel>], iteration_bounds = array<i64: 2>, scalar_prefetch = 0 : i64, scratch_operands = 0 : i64, tpu.core_type = #tpu.core_type<tc>, window_params = [{transform_indices = @transform_0, window_bounds = array<i64: 1, 8, 8>}, {transform_indices = @transform_1, window_bounds = array<i64: 1, 8, 16>}, {transform_indices = @transform_2, window_bounds = array<i64: 1, 8, 4>}, {transform_indices = @transform_3, window_bounds = array<i64: 1, 16, 1>}, {pipeline_mode = #tpu.pipeline_mode<synchronous>, transform_indices = @transform_4, window_bounds = array<i64: 4, 10>}, {pipeline_mode = #tpu.pipeline_mode<synchronous>, transform_indices = @transform_5, window_bounds = array<i64: 1, 10>}, {pipeline_mode = #tpu.pipeline_mode<synchronous>, transform_indices = @transform_6, window_bounds = array<i64: 1, 10>}, {pipeline_mode = #tpu.pipeline_mode<synchronous>, transform_indices = @transform_7, window_bounds = array<i64: 4, 10>}, {pipeline_mode = #tpu.pipeline_mode<synchronous>, transform_indices = @transform_8, window_bounds = array<i64: 1, 10>}, {pipeline_mode = #tpu.pipeline_mode<synchronous>, transform_indices = @transform_9, window_bounds = array<i64: 1, 10>}, {pipeline_mode = #tpu.pipeline_mode<synchronous>, transform_indices = @transform_10, window_bounds = array<i64: 10, 2>}, {pipeline_mode = #tpu.pipeline_mode<synchronous>, transform_indices = @transform_11, window_bounds = array<i64: 10, 2>}, {transform_indices = @transform_12, window_bounds = array<i64: 1, 1, 1>}]} {
    %c0 = arith.constant 0 : index
    %c0_0 = arith.constant 0 : index
    %c0_1 = arith.constant 0 : index
    %0 = vector.load %arg1[%c0, %c0_0, %c0_1] : memref<1x8x8xf32, #tpu.memory_space<vmem>>, vector<1x8x8xf32>
    %c0_2 = arith.constant 0 : index
    %c0_3 = arith.constant 0 : index
    %c0_4 = arith.constant 0 : index
    %1 = vector.load %arg2[%c0_2, %c0_3, %c0_4] : memref<1x8x16xf32, #tpu.memory_space<vmem>>, vector<1x8x16xf32>
    %c0_5 = arith.constant 0 : index
    %c0_6 = arith.constant 0 : index
    %c0_7 = arith.constant 0 : index
    %2 = vector.load %arg3[%c0_5, %c0_6, %c0_7] : memref<1x8x4xf32, #tpu.memory_space<vmem>>, vector<1x8x4xf32>
    %c0_8 = arith.constant 0 : index
    %c0_9 = arith.constant 0 : index
    %c0_10 = arith.constant 0 : index
    %3 = vector.load %arg4[%c0_8, %c0_9, %c0_10] : memref<1x16x1xf32, #tpu.memory_space<vmem>>, vector<1x16x1xf32>
    %cst = arith.constant dense<0.000000e+00> : vector<1x8x4xf32>
    %4 = tpu.matmul %0, %2, %cst {dimension_numbers = #tpu.dot_dimension_numbers<[2], [1], [1], [2], [0, 0, 0, 1, 1, 2], [0], [0]>} : vector<1x8x8xf32>, vector<1x8x4xf32>, vector<1x8x4xf32> -> vector<1x8x4xf32>
    %cst_11 = arith.constant dense<0.000000e+00> : vector<1x8x1xf32>
    %5 = tpu.matmul %1, %3, %cst_11 {dimension_numbers = #tpu.dot_dimension_numbers<[2], [1], [1], [2], [0, 0, 0, 1, 1, 2], [0], [0]>} : vector<1x8x16xf32>, vector<1x16x1xf32>, vector<1x8x1xf32> -> vector<1x8x1xf32>
    %c0_12 = arith.constant 0 : index
    %c0_13 = arith.constant 0 : index
    %6 = vector.load %arg5[%c0_12, %c0_13] : memref<4x10xf32, #tpu.memory_space<vmem>>, vector<4x10xf32>
    %7 = vector.shape_cast %4 : vector<1x8x4xf32> to vector<8x4xf32>
    %cst_14 = arith.constant dense<0.000000e+00> : vector<8x10xf32>
    %8 = tpu.matmul %7, %6, %cst_14 {dimension_numbers = #tpu.dot_dimension_numbers<[1], [0], [0], [1], [0, 0, 1, 1], [], []>} : vector<8x4xf32>, vector<4x10xf32>, vector<8x10xf32> -> vector<8x10xf32>
    %9 = vector.shape_cast %8 : vector<8x10xf32> to vector<1x8x10xf32>
    %c0_15 = arith.constant 0 : index
    %c0_16 = arith.constant 0 : index
    %10 = vector.load %arg6[%c0_15, %c0_16] : memref<1x10xf32, #tpu.memory_space<vmem>>, vector<1x10xf32>
    %11 = vector.shape_cast %10 : vector<1x10xf32> to vector<1x1x10xf32>
    %12 = vector.broadcast %5 : vector<1x8x1xf32> to vector<1x8x10xf32>
    %13 = vector.broadcast %11 : vector<1x1x10xf32> to vector<1x8x10xf32>
    %14 = arith.mulf %12, %13 : vector<1x8x10xf32>
    %15 = arith.addf %9, %14 : vector<1x8x10xf32>
    %c0_17 = arith.constant 0 : index
    %c0_18 = arith.constant 0 : index
    %16 = vector.load %arg7[%c0_17, %c0_18] : memref<1x10xf32, #tpu.memory_space<vmem>>, vector<1x10xf32>
    %17 = vector.shape_cast %16 : vector<1x10xf32> to vector<1x1x10xf32>
    %18 = vector.broadcast %17 : vector<1x1x10xf32> to vector<1x8x10xf32>
    %19 = arith.addf %15, %18 : vector<1x8x10xf32>
    %cst_19 = arith.constant 0.000000e+00 : f32
    %20 = vector.broadcast %cst_19 : f32 to vector<1x8x10xf32>
    %21 = arith.maximumf %19, %20 : vector<1x8x10xf32>
    %cst_20 = arith.constant dense<0.000000e+00> : vector<1x16x4xf32>
    %22 = tpu.matmul %1, %2, %cst_20 {dimension_numbers = #tpu.dot_dimension_numbers<[1], [1], [2], [2], [0, 0, 0, 2, 1, 2], [0], [0]>} : vector<1x8x16xf32>, vector<1x8x4xf32>, vector<1x16x4xf32> -> vector<1x16x4xf32>
    %c0_21 = arith.constant 0 : index
    %c0_22 = arith.constant 0 : index
    %23 = vector.load %arg8[%c0_21, %c0_22] : memref<4x10xf32, #tpu.memory_space<vmem>>, vector<4x10xf32>
    %24 = vector.shape_cast %22 : vector<1x16x4xf32> to vector<16x4xf32>
    %cst_23 = arith.constant dense<0.000000e+00> : vector<16x10xf32>
    %25 = tpu.matmul %24, %23, %cst_23 {dimension_numbers = #tpu.dot_dimension_numbers<[1], [0], [0], [1], [0, 0, 1, 1], [], []>} : vector<16x4xf32>, vector<4x10xf32>, vector<16x10xf32> -> vector<16x10xf32>
    %26 = vector.shape_cast %25 : vector<16x10xf32> to vector<1x16x10xf32>
    %c0_24 = arith.constant 0 : index
    %c0_25 = arith.constant 0 : index
    %27 = vector.load %arg9[%c0_24, %c0_25] : memref<1x10xf32, #tpu.memory_space<vmem>>, vector<1x10xf32>
    %28 = vector.shape_cast %27 : vector<1x10xf32> to vector<1x1x10xf32>
    %29 = vector.broadcast %3 : vector<1x16x1xf32> to vector<1x16x10xf32>
    %30 = vector.broadcast %28 : vector<1x1x10xf32> to vector<1x16x10xf32>
    %31 = arith.mulf %29, %30 : vector<1x16x10xf32>
    %32 = arith.addf %26, %31 : vector<1x16x10xf32>
    %c0_26 = arith.constant 0 : index
    %c0_27 = arith.constant 0 : index
    %33 = vector.load %arg10[%c0_26, %c0_27] : memref<1x10xf32, #tpu.memory_space<vmem>>, vector<1x10xf32>
    %34 = vector.shape_cast %33 : vector<1x10xf32> to vector<1x1x10xf32>
    %35 = vector.broadcast %34 : vector<1x1x10xf32> to vector<1x16x10xf32>
    %36 = arith.addf %32, %35 : vector<1x16x10xf32>
    %cst_28 = arith.constant 0.000000e+00 : f32
    %37 = vector.broadcast %cst_28 : f32 to vector<1x16x10xf32>
    %38 = arith.maximumf %36, %37 : vector<1x16x10xf32>
    %cst_29 = arith.constant dense<0.000000e+00> : vector<1x8x10xf32>
    %39 = tpu.matmul %0, %21, %cst_29 {dimension_numbers = #tpu.dot_dimension_numbers<[2], [1], [1], [2], [0, 0, 0, 1, 1, 2], [0], [0]>} : vector<1x8x8xf32>, vector<1x8x10xf32>, vector<1x8x10xf32> -> vector<1x8x10xf32>
    %cst_30 = arith.constant dense<0.000000e+00> : vector<1x8x10xf32>
    %40 = tpu.matmul %1, %38, %cst_30 {dimension_numbers = #tpu.dot_dimension_numbers<[2], [1], [1], [2], [0, 0, 0, 1, 1, 2], [0], [0]>} : vector<1x8x16xf32>, vector<1x16x10xf32>, vector<1x8x10xf32> -> vector<1x8x10xf32>
    %c0_31 = arith.constant 0 : index
    %c0_32 = arith.constant 0 : index
    %41 = vector.load %arg11[%c0_31, %c0_32] : memref<10x2xf32, #tpu.memory_space<vmem>>, vector<10x2xf32>
    %42 = vector.shape_cast %39 : vector<1x8x10xf32> to vector<8x10xf32>
    %cst_33 = arith.constant dense<0.000000e+00> : vector<8x2xf32>
    %43 = tpu.matmul %42, %41, %cst_33 {dimension_numbers = #tpu.dot_dimension_numbers<[1], [0], [0], [1], [0, 0, 1, 1], [], []>} : vector<8x10xf32>, vector<10x2xf32>, vector<8x2xf32> -> vector<8x2xf32>
    %44 = vector.shape_cast %43 : vector<8x2xf32> to vector<1x8x2xf32>
    %c0_34 = arith.constant 0 : index
    %c0_35 = arith.constant 0 : index
    %45 = vector.load %arg12[%c0_34, %c0_35] : memref<10x2xf32, #tpu.memory_space<vmem>>, vector<10x2xf32>
    %46 = vector.shape_cast %40 : vector<1x8x10xf32> to vector<8x10xf32>
    %cst_36 = arith.constant dense<0.000000e+00> : vector<8x2xf32>
    %47 = tpu.matmul %46, %45, %cst_36 {dimension_numbers = #tpu.dot_dimension_numbers<[1], [0], [0], [1], [0, 0, 1, 1], [], []>} : vector<8x10xf32>, vector<10x2xf32>, vector<8x2xf32> -> vector<8x2xf32>
    %48 = vector.shape_cast %47 : vector<8x2xf32> to vector<1x8x2xf32>
    %49 = arith.addf %44, %48 : vector<1x8x2xf32>
    %50 = vector.shape_cast %49 : vector<1x8x2xf32> to vector<1x1x8x2xf32>
    %cst_37 = arith.constant dense<0.000000e+00> : vector<1xf32>
    %51 = vector.multi_reduction <add>, %50, %cst_37 [1, 2, 3] : vector<1x1x8x2xf32> to vector<1xf32>
    %52 = vector.shape_cast %51 : vector<1xf32> to vector<1x1x1x1xf32>
    %53 = vector.extract %52[0, 0, 0, 0] : f32 from vector<1x1x1x1xf32>
    %54 = vector.broadcast %53 : f32 to vector<1x1x1xf32>
    %c0_38 = arith.constant 0 : index
    %c0_39 = arith.constant 0 : index
    %c0_40 = arith.constant 0 : index
    %55 = vector.load %arg13[%c0_38, %c0_39, %c0_40] : memref<1x1x1xf32, #tpu.memory_space<vmem>>, vector<1x1x1xf32>
    tpu.vector_store %arg13[%c0_38, %c0_39, %c0_40], %54 {strides = array<i32>} : memref<1x1x1xf32, #tpu.memory_space<vmem>>, vector<1x1x1xf32>,
    return
  }
  func.func @transform_0(%arg0: i32) -> (i32, i32, i32) {
    %c0_i32 = arith.constant 0 : i32
    %c0_i32_0 = arith.constant 0 : i32
    %c0_i32_1 = arith.constant 0 : i32
    return %arg0, %c0_i32, %c0_i32_0 : i32, i32, i32
  }
  func.func @transform_1(%arg0: i32) -> (i32, i32, i32) {
    %c0_i32 = arith.constant 0 : i32
    %c0_i32_0 = arith.constant 0 : i32
    %c0_i32_1 = arith.constant 0 : i32
    return %arg0, %c0_i32, %c0_i32_0 : i32, i32, i32
  }
  func.func @transform_2(%arg0: i32) -> (i32, i32, i32) {
    %c0_i32 = arith.constant 0 : i32
    %c0_i32_0 = arith.constant 0 : i32
    %c0_i32_1 = arith.constant 0 : i32
    return %arg0, %c0_i32, %c0_i32_0 : i32, i32, i32
  }
  func.func @transform_3(%arg0: i32) -> (i32, i32, i32) {
    %c0_i32 = arith.constant 0 : i32
    %c0_i32_0 = arith.constant 0 : i32
    %c0_i32_1 = arith.constant 0 : i32
    return %arg0, %c0_i32, %c0_i32_0 : i32, i32, i32
  }
  func.func @transform_4(%arg0: i32) -> (i32, i32) {
    %c0_i32 = arith.constant 0 : i32
    %c0_i32_0 = arith.constant 0 : i32
    %c0_i32_1 = arith.constant 0 : i32
    return %c0_i32, %c0_i32_0 : i32, i32
  }
  func.func @transform_5(%arg0: i32) -> (i32, i32) {
    %c0_i32 = arith.constant 0 : i32
    %c0_i32_0 = arith.constant 0 : i32
    %c0_i32_1 = arith.constant 0 : i32
    return %c0_i32, %c0_i32_0 : i32, i32
  }
  func.func @transform_6(%arg0: i32) -> (i32, i32) {
    %c0_i32 = arith.constant 0 : i32
    %c0_i32_0 = arith.constant 0 : i32
    %c0_i32_1 = arith.constant 0 : i32
    return %c0_i32, %c0_i32_0 : i32, i32
  }
  func.func @transform_7(%arg0: i32) -> (i32, i32) {
    %c0_i32 = arith.constant 0 : i32
    %c0_i32_0 = arith.constant 0 : i32
    %c0_i32_1 = arith.constant 0 : i32
    return %c0_i32, %c0_i32_0 : i32, i32
  }
  func.func @transform_8(%arg0: i32) -> (i32, i32) {
    %c0_i32 = arith.constant 0 : i32
    %c0_i32_0 = arith.constant 0 : i32
    %c0_i32_1 = arith.constant 0 : i32
    return %c0_i32, %c0_i32_0 : i32, i32
  }
  func.func @transform_9(%arg0: i32) -> (i32, i32) {
    %c0_i32 = arith.constant 0 : i32
    %c0_i32_0 = arith.constant 0 : i32
    %c0_i32_1 = arith.constant 0 : i32
    return %c0_i32, %c0_i32_0 : i32, i32
  }
  func.func @transform_10(%arg0: i32) -> (i32, i32) {
    %c0_i32 = arith.constant 0 : i32
    %c0_i32_0 = arith.constant 0 : i32
    %c0_i32_1 = arith.constant 0 : i32
    return %c0_i32, %c0_i32_0 : i32, i32
  }
  func.func @transform_11(%arg0: i32) -> (i32, i32) {
    %c0_i32 = arith.constant 0 : i32
    %c0_i32_0 = arith.constant 0 : i32
    %c0_i32_1 = arith.constant 0 : i32
    return %c0_i32, %c0_i32_0 : i32, i32
  }
  func.func @transform_12(%arg0: i32) -> (i32, i32, i32) {
    %c0_i32 = arith.constant 0 : i32
    %c0_i32_0 = arith.constant 0 : i32
    %c0_i32_1 = arith.constant 0 : i32
    return %arg0, %c0_i32, %c0_i32_0 : i32, i32, i32
  }
}

</mosaic_0001>

<llo_original>
// kernel: tpu_custom_call.1
$region0: #{tpu_custom_call.1}
  #allocation0 [shape = 'u32[]', space=smem, size = 0x4, offset = 0x4, fixed_abs, tag = 'smem constant byte address 0x4 - core index']
  #allocation1 [shape = 'u32[144,128]{1,0:T(1,128)}', space=vmem, size = 0x12000, scoped, tag = 'internal scratch']
  %s0 = inlined_call_operand.vmem [shape: f32[2,8,8], index: 0, kind: input, shape index: {}]
  %s1 = inlined_call_operand.vmem [shape: f32[2,8,16], index: 1, kind: input, shape index: {}]
  %s2 = inlined_call_operand.vmem [shape: f32[2,8,4], index: 2, kind: input, shape index: {}]
  %s3 = inlined_call_operand.vmem [shape: f32[2,16,1], index: 3, kind: input, shape index: {}]
  %s4 = inlined_call_operand.vmem [shape: f32[4,10], index: 4, kind: input, shape index: {}]
  %s5 = inlined_call_operand.vmem [shape: f32[1,10], index: 5, kind: input, shape index: {}]
  %s6 = inlined_call_operand.vmem [shape: f32[1,10], index: 6, kind: input, shape index: {}]
  %s7 = inlined_call_operand.vmem [shape: f32[4,10], index: 7, kind: input, shape index: {}]
  %s8 = inlined_call_operand.vmem [shape: f32[1,10], index: 8, kind: input, shape index: {}]
  %s9 = inlined_call_operand.vmem [shape: f32[1,10], index: 9, kind: input, shape index: {}]
  %s10 = inlined_call_operand.vmem [shape: f32[10,2], index: 10, kind: input, shape index: {}]
  %s11 = inlined_call_operand.vmem [shape: f32[10,2], index: 11, kind: input, shape index: {}]
  %s12 = inlined_call_operand.vmem [shape: f32[2,1,1], index: 12, kind: output, shape index: {}]
  %s13 = sld [smem:[#allocation0]]
  $region81: #{tpu_custom_call.1} parent=0
    _
  %s15 = ssub.s32 1, %s13
  %s16 = scalar_select 0, %s15, %s13
  loop: start=0, step=1, limit=4
  $region2: #{tpu_custom_call.1} parent=0 // loop_pre_header
    _
  $region3: #{tpu_custom_call.1} parent=0 // loop_header
    %s18 = sphi 0, %s22
    %p19 = scmp.ge.s32.totalorder %s18, 4
    %s28 = sphi 0, %s30
    %s31 = sphi 0, %s28
    %s32 = sphi 0, %s31
    %s48 = sphi 0, %s32
    %s54 = sphi 0, %s56
    %s57 = sphi 0, %s54
    %s58 = sphi 0, %s57
    %s74 = sphi 0, %s58
    %s80 = sphi 0, %s82
    %s83 = sphi 0, %s80
    %s84 = sphi 0, %s83
    %s100 = sphi 0, %s84
    %s106 = sphi 0, %s108
    %s109 = sphi 0, %s106
    %s110 = sphi 0, %s109
    %s126 = sphi 0, %s110
    %s130 = sphi 0, %s130
    %s132 = sphi 0, %s130
    %s133 = sphi 0, %s132
    %s147 = sphi 0, %s133
    %s151 = sphi 0, %s151
    %s153 = sphi 0, %s151
    %s154 = sphi 0, %s153
    %s168 = sphi 0, %s154
    %s172 = sphi 0, %s172
    %s174 = sphi 0, %s172
    %s175 = sphi 0, %s174
    %s189 = sphi 0, %s175
    %s193 = sphi 0, %s193
    %s195 = sphi 0, %s193
    %s196 = sphi 0, %s195
    %s210 = sphi 0, %s196
    %s214 = sphi 0, %s214
    %s216 = sphi 0, %s214
    %s217 = sphi 0, %s216
    %s231 = sphi 0, %s217
    %s235 = sphi 0, %s235
    %s237 = sphi 0, %s235
    %s238 = sphi 0, %s237
    %s252 = sphi 0, %s238
    %s256 = sphi 0, %s256
    %s258 = sphi 0, %s256
    %s259 = sphi 0, %s258
    %s273 = sphi 0, %s259
    %s277 = sphi 0, %s277
    %s279 = sphi 0, %s277
    %s280 = sphi 0, %s279
    %s294 = sphi 0, %s280
    %s300 = sphi 0, %s302
    %s303 = sphi 0, %s300
    %s304 = sphi 0, %s303
    %s320 = sphi 0, %s304
  $region4: #{tpu_custom_call.1} parent=0 // loop_header_branch
    %21 = sbr.rel (%p19) target = $region8
  $region5: #{tpu_custom_call.1} parent=0 // loop_body
    %s23 = ssub.s32 %s18, 1
    %s24 = ssub.s32 %s18, 2
    %s25 = sadd.s32 %s18, 1
    %s26 = ssub.s32 %s18, %s25
    %p27 = scmp.eq.s32.totalorder %s26, 0
    %s29 = sadd.s32 %s28, 1
    %s30 = scalar_select %p27, %s28, %s29
    %p33 = pneg %p27
    %p34 = scmp.eq.s32.totalorder %s18, 1
    %p35 = por %p33, %p34
    %p36 = scmp.ne.s32.totalorder %s28, %s31
    %p37 = scmp.eq.s32.totalorder %s18, 0
    %p38 = por %p36, %p37
    %p39 = scmp.ne.s32.totalorder %s28, %s31
    %p40 = scmp.eq.s32.totalorder %s23, 1
    %p41 = por %p39, %p40
    %p42 = scmp.ne.s32.totalorder %s31, %s32
    %p43 = scmp.eq.s32.totalorder %s23, 0
    %p44 = por %p42, %p43
    %p45 = scmp.ne.s32.totalorder %s31, %s32
    %p46 = scmp.eq.s32.totalorder %s24, 1
    %p47 = por %p45, %p46
    %p49 = scmp.ne.s32.totalorder %s32, %s48
    %p50 = scmp.eq.s32.totalorder %s24, 0
    %p51 = por %p49, %p50
    %s52 = ssub.s32 %s18, %s25
    %p53 = scmp.eq.s32.totalorder %s52, 0
    %s55 = sadd.s32 %s54, 1
    %s56 = scalar_select %p53, %s54, %s55
    %p59 = pneg %p53
    %p60 = scmp.eq.s32.totalorder %s18, 1
    %p61 = por %p59, %p60
    %p62 = scmp.ne.s32.totalorder %s54, %s57
    %p63 = scmp.eq.s32.totalorder %s18, 0
    %p64 = por %p62, %p63
    %p65 = scmp.ne.s32.totalorder %s54, %s57
    %p66 = scmp.eq.s32.totalorder %s23, 1
    %p67 = por %p65, %p66
    %p68 = scmp.ne.s32.totalorder %s57, %s58
    %p69 = scmp.eq.s32.totalorder %s23, 0
    %p70 = por %p68, %p69
    %p71 = scmp.ne.s32.totalorder %s57, %s58
    %p72 = scmp.eq.s32.totalorder %s24, 1
    %p73 = por %p71, %p72
    %p75 = scmp.ne.s32.totalorder %s58, %s74
    %p76 = scmp.eq.s32.totalorder %s24, 0
    %p77 = por %p75, %p76
    %s78 = ssub.s32 %s18, %s25
    %p79 = scmp.eq.s32.totalorder %s78, 0
    %s81 = sadd.s32 %s80, 1
    %s82 = scalar_select %p79, %s80, %s81
    %p85 = pneg %p79
    %p86 = scmp.eq.s32.totalorder %s18, 1
    %p87 = por %p85, %p86
    %p88 = scmp.ne.s32.totalorder %s80, %s83
    %p89 = scmp.eq.s32.totalorder %s18, 0
    %p90 = por %p88, %p89
    %p91 = scmp.ne.s32.totalorder %s80, %s83
    %p92 = scmp.eq.s32.totalorder %s23, 1
    %p93 = por %p91, %p92
    %p94 = scmp.ne.s32.totalorder %s83, %s84
    %p95 = scmp.eq.s32.totalorder %s23, 0
    %p96 = por %p94, %p95
    %p97 = scmp.ne.s32.totalorder %s83, %s84
    %p98 = scmp.eq.s32.totalorder %s24, 1
    %p99 = por %p97, %p98
    %p101 = scmp.ne.s32.totalorder %s84, %s100
    %p102 = scmp.eq.s32.totalorder %s24, 0
    %p103 = por %p101, %p102
    %s104 = ssub.s32 %s18, %s25
    %p105 = scmp.eq.s32.totalorder %s104, 0
    %s107 = sadd.s32 %s106, 1
    %s108 = scalar_select %p105, %s106, %s107
    %p111 = pneg %p105
    %p112 = scmp.eq.s32.totalorder %s18, 1
    %p113 = por %p111, %p112
    %p114 = scmp.ne.s32.totalorder %s106, %s109
    %p115 = scmp.eq.s32.totalorder %s18, 0
    %p116 = por %p114, %p115
    %p117 = scmp.ne.s32.totalorder %s106, %s109
    %p118 = scmp.eq.s32.totalorder %s23, 1
    %p119 = por %p117, %p118
    %p120 = scmp.ne.s32.totalorder %s109, %s110
    %p121 = scmp.eq.s32.totalorder %s23, 0
    %p122 = por %p120, %p121
    %p123 = scmp.ne.s32.totalorder %s109, %s110
    %p124 = scmp.eq.s32.totalorder %s24, 1
    %p125 = por %p123, %p124
    %p127 = scmp.ne.s32.totalorder %s110, %s126
    %p128 = scmp.eq.s32.totalorder %s24, 0
    %p129 = por %p127, %p128
    %s131 = sadd.s32 %s130, 1
    %p134 = scmp.eq.s32.totalorder %s18, 1
    %p135 = scmp.ne.s32.totalorder %s130, %s132
    %p136 = scmp.eq.s32.totalorder %s18, 0
    %p137 = por %p135, %p136
    %p138 = scmp.ne.s32.totalorder %s130, %s132
    %p139 = scmp.eq.s32.totalorder %s23, 1
    %p140 = por %p138, %p139
    %p141 = scmp.ne.s32.totalorder %s132, %s133
    %p142 = scmp.eq.s32.totalorder %s23, 0
    %p143 = por %p141, %p142
    %p144 = scmp.ne.s32.totalorder %s132, %s133
    %p145 = scmp.eq.s32.totalorder %s24, 1
    %p146 = por %p144, %p145
    %p148 = scmp.ne.s32.totalorder %s133, %s147
    %p149 = scmp.eq.s32.totalorder %s24, 0
    %p150 = por %p148, %p149
    %s152 = sadd.s32 %s151, 1
    %p155 = scmp.eq.s32.totalorder %s18, 1
    %p156 = scmp.ne.s32.totalorder %s151, %s153
    %p157 = scmp.eq.s32.totalorder %s18, 0
    %p158 = por %p156, %p157
    %p159 = scmp.ne.s32.totalorder %s151, %s153
    %p160 = scmp.eq.s32.totalorder %s23, 1
    %p161 = por %p159, %p160
    %p162 = scmp.ne.s32.totalorder %s153, %s154
    %p163 = scmp.eq.s32.totalorder %s23, 0
    %p164 = por %p162, %p163
    %p165 = scmp.ne.s32.totalorder %s153, %s154
    %p166 = scmp.eq.s32.totalorder %s24, 1
    %p167 = por %p165, %p166
    %p169 = scmp.ne.s32.totalorder %s154, %s168
    %p170 = scmp.eq.s32.totalorder %s24, 0
    %p171 = por %p169, %p170
    %s173 = sadd.s32 %s172, 1
    %p176 = scmp.eq.s32.totalorder %s18, 1
    %p177 = scmp.ne.s32.totalorder %s172, %s174
    %p178 = scmp.eq.s32.totalorder %s18, 0
    %p179 = por %p177, %p178
    %p180 = scmp.ne.s32.totalorder %s172, %s174
    %p181 = scmp.eq.s32.totalorder %s23, 1
    %p182 = por %p180, %p181
    %p183 = scmp.ne.s32.totalorder %s174, %s175
    %p184 = scmp.eq.s32.totalorder %s23, 0
    %p185 = por %p183, %p184
    %p186 = scmp.ne.s32.totalorder %s174, %s175
    %p187 = scmp.eq.s32.totalorder %s24, 1
    %p188 = por %p186, %p187
    %p190 = scmp.ne.s32.totalorder %s175, %s189
    %p191 = scmp.eq.s32.totalorder %s24, 0
    %p192 = por %p190, %p191
    %s194 = sadd.s32 %s193, 1
    %p197 = scmp.eq.s32.totalorder %s18, 1
    %p198 = scmp.ne.s32.totalorder %s193, %s195
    %p199 = scmp.eq.s32.totalorder %s18, 0
    %p200 = por %p198, %p199
    %p201 = scmp.ne.s32.totalorder %s193, %s195
    %p202 = scmp.eq.s32.totalorder %s23, 1
    %p203 = por %p201, %p202
    %p204 = scmp.ne.s32.totalorder %s195, %s196
    %p205 = scmp.eq.s32.totalorder %s23, 0
    %p206 = por %p204, %p205
    %p207 = scmp.ne.s32.totalorder %s195, %s196
    %p208 = scmp.eq.s32.totalorder %s24, 1
    %p209 = por %p207, %p208
    %p211 = scmp.ne.s32.totalorder %s196, %s210
    %p212 = scmp.eq.s32.totalorder %s24, 0
    %p213 = por %p211, %p212
    %s215 = sadd.s32 %s214, 1
    %p218 = scmp.eq.s32.totalorder %s18, 1
    %p219 = scmp.ne.s32.totalorder %s214, %s216
    %p220 = scmp.eq.s32.totalorder %s18, 0
    %p221 = por %p219, %p220
    %p222 = scmp.ne.s32.totalorder %s214, %s216
    %p223 = scmp.eq.s32.totalorder %s23, 1
    %p224 = por %p222, %p223
    %p225 = scmp.ne.s32.totalorder %s216, %s217
    %p226 = scmp.eq.s32.totalorder %s23, 0
    %p227 = por %p225, %p226
    %p228 = scmp.ne.s32.totalorder %s216, %s217
    %p229 = scmp.eq.s32.totalorder %s24, 1
    %p230 = por %p228, %p229
    %p232 = scmp.ne.s32.totalorder %s217, %s231
    %p233 = scmp.eq.s32.totalorder %s24, 0
    %p234 = por %p232, %p233
    %s236 = sadd.s32 %s235, 1
    %p239 = scmp.eq.s32.totalorder %s18, 1
    %p240 = scmp.ne.s32.totalorder %s235, %s237
    %p241 = scmp.eq.s32.totalorder %s18, 0
    %p242 = por %p240, %p241
    %p243 = scmp.ne.s32.totalorder %s235, %s237
    %p244 = scmp.eq.s32.totalorder %s23, 1
    %p245 = por %p243, %p244
    %p246 = scmp.ne.s32.totalorder %s237, %s238
    %p247 = scmp.eq.s32.totalorder %s23, 0
    %p248 = por %p246, %p247
    %p249 = scmp.ne.s32.totalorder %s237, %s238
    %p250 = scmp.eq.s32.totalorder %s24, 1
    %p251 = por %p249, %p250
    %p253 = scmp.ne.s32.totalorder %s238, %s252
    %p254 = scmp.eq.s32.totalorder %s24, 0
    %p255 = por %p253, %p254
    %s257 = sadd.s32 %s256, 1
    %p260 = scmp.eq.s32.totalorder %s18, 1
    %p261 = scmp.ne.s32.totalorder %s256, %s258
    %p262 = scmp.eq.s32.totalorder %s18, 0
    %p263 = por %p261, %p262
    %p264 = scmp.ne.s32.totalorder %s256, %s258
    %p265 = scmp.eq.s32.totalorder %s23, 1
    %p266 = por %p264, %p265
    %p267 = scmp.ne.s32.totalorder %s258, %s259
    %p268 = scmp.eq.s32.totalorder %s23, 0
    %p269 = por %p267, %p268
    %p270 = scmp.ne.s32.totalorder %s258, %s259
    %p271 = scmp.eq.s32.totalorder %s24, 1
    %p272 = por %p270, %p271
    %p274 = scmp.ne.s32.totalorder %s259, %s273
    %p275 = scmp.eq.s32.totalorder %s24, 0
    %p276 = por %p274, %p275
    %s278 = sadd.s32 %s277, 1
    %p281 = scmp.eq.s32.totalorder %s18, 1
    %p282 = scmp.ne.s32.totalorder %s277, %s279
    %p283 = scmp.eq.s32.totalorder %s18, 0
    %p284 = por %p282, %p283
    %p285 = scmp.ne.s32.totalorder %s277, %s279
    %p286 = scmp.eq.s32.totalorder %s23, 1
    %p287 = por %p285, %p286
    %p288 = scmp.ne.s32.totalorder %s279, %s280
    %p289 = scmp.eq.s32.totalorder %s23, 0
    %p290 = por %p288, %p289
    %p291 = scmp.ne.s32.totalorder %s279, %s280
    %p292 = scmp.eq.s32.totalorder %s24, 1
    %p293 = por %p291, %p292
    %p295 = scmp.ne.s32.totalorder %s280, %s294
    %p296 = scmp.eq.s32.totalorder %s24, 0
    %p297 = por %p295, %p296
    %s298 = ssub.s32 %s18, %s25
    %p299 = scmp.eq.s32.totalorder %s298, 0
    %s301 = sadd.s32 %s300, 1
    %s302 = scalar_select %p299, %s300, %s301
    %p305 = pneg %p299
    %p306 = scmp.eq.s32.totalorder %s18, 1
    %p307 = por %p305, %p306
    %p308 = scmp.ne.s32.totalorder %s300, %s303
    %p309 = scmp.eq.s32.totalorder %s18, 0
    %p310 = por %p308, %p309
    %p311 = scmp.ne.s32.totalorder %s300, %s303
    %p312 = scmp.eq.s32.totalorder %s23, 1
    %p313 = por %p311, %p312
    %p314 = scmp.ne.s32.totalorder %s303, %s304
    %p315 = scmp.eq.s32.totalorder %s23, 0
    %p316 = por %p314, %p315
    %p317 = scmp.ne.s32.totalorder %s303, %s304
    %p318 = scmp.eq.s32.totalorder %s24, 1
    %p319 = por %p317, %p318
    %p321 = scmp.ne.s32.totalorder %s304, %s320
    %p322 = scmp.eq.s32.totalorder %s24, 0
    %p323 = por %p321, %p322
    %p324 = scmp.le.s32.totalorder 1, %s18
    %p325 = scmp.lt.s32.totalorder %s18, 3
    %p326 = pnand %p324, %p325
    %p327 = pneg %p326
    // Predicated region
    $region9: #{tpu_custom_call.1} parent=5 // pred_check
      _
    $region10: #{tpu_custom_call.1} parent=5 // pred_check_branch
      %329 = sbr.rel (%p326) target = $region12
    $region11: #{tpu_custom_call.1} parent=5 // pred_region
      %s330 = ssub.s32 %s18, 1
      // Predicated region
      $region13: #{tpu_custom_call.1} parent=11 // pred_check
        %p331 = pneg %p143
      $region14: #{tpu_custom_call.1} parent=11 // pred_check_branch
        %333 = sbr.rel (%p331) target = $region16
      $region15: #{tpu_custom_call.1} parent=11 // pred_region
        _
      $region16: #{tpu_custom_call.1} parent=11 // pred_fallthru
        _
      // Predicated region
      $region17: #{tpu_custom_call.1} parent=11 // pred_check
        %p334 = pneg %p164
      $region18: #{tpu_custom_call.1} parent=11 // pred_check_branch
        %336 = sbr.rel (%p334) target = $region20
      $region19: #{tpu_custom_call.1} parent=11 // pred_region
        _
      $region20: #{tpu_custom_call.1} parent=11 // pred_fallthru
        _
      // Predicated region
      $region21: #{tpu_custom_call.1} parent=11 // pred_check
        %p337 = pneg %p185
      $region22: #{tpu_custom_call.1} parent=11 // pred_check_branch
        %339 = sbr.rel (%p337) target = $region24
      $region23: #{tpu_custom_call.1} parent=11 // pred_region
        _
      $region24: #{tpu_custom_call.1} parent=11 // pred_fallthru
        _
      // Predicated region
      $region25: #{tpu_custom_call.1} parent=11 // pred_check
        %p340 = pneg %p206
      $region26: #{tpu_custom_call.1} parent=11 // pred_check_branch
        %342 = sbr.rel (%p340) target = $region28
      $region27: #{tpu_custom_call.1} parent=11 // pred_region
        _
      $region28: #{tpu_custom_call.1} parent=11 // pred_fallthru
        _
      // Predicated region
      $region29: #{tpu_custom_call.1} parent=11 // pred_check
        %p343 = pneg %p227
      $region30: #{tpu_custom_call.1} parent=11 // pred_check_branch
        %345 = sbr.rel (%p343) target = $region32
      $region31: #{tpu_custom_call.1} parent=11 // pred_region
        _
      $region32: #{tpu_custom_call.1} parent=11 // pred_fallthru
        _
      // Predicated region
      $region33: #{tpu_custom_call.1} parent=11 // pred_check
        %p346 = pneg %p248
      $region34: #{tpu_custom_call.1} parent=11 // pred_check_branch
        %348 = sbr.rel (%p346) target = $region36
      $region35: #{tpu_custom_call.1} parent=11 // pred_region
        _
      $region36: #{tpu_custom_call.1} parent=11 // pred_fallthru
        _
      // Predicated region
      $region37: #{tpu_custom_call.1} parent=11 // pred_check
        %p349 = pneg %p269
      $region38: #{tpu_custom_call.1} parent=11 // pred_check_branch
        %351 = sbr.rel (%p349) target = $region40
      $region39: #{tpu_custom_call.1} parent=11 // pred_region
        _
      $region40: #{tpu_custom_call.1} parent=11 // pred_fallthru
        _
      // Predicated region
      $region41: #{tpu_custom_call.1} parent=11 // pred_check
        %p352 = pneg %p290
      $region42: #{tpu_custom_call.1} parent=11 // pred_check_branch
        %354 = sbr.rel (%p352) target = $region44
      $region43: #{tpu_custom_call.1} parent=11 // pred_region
        _
      $region44: #{tpu_custom_call.1} parent=11 // pred_fallthru
        _
    $region12: #{tpu_custom_call.1} parent=5 // pred_fallthru
      _
    %p355 = scmp.lt.s32.totalorder %s18, 2
    // Predicated region
    $region45: #{tpu_custom_call.1} parent=5 // pred_check
      %p356 = pneg %p355
    $region46: #{tpu_custom_call.1} parent=5 // pred_check_branch
      %358 = sbr.rel (%p356) target = $region48
    $region47: #{tpu_custom_call.1} parent=5 // pred_region
      // Predicated region
      $region49: #{tpu_custom_call.1} parent=47 // pred_check
        %p359 = pneg %p38
      $region50: #{tpu_custom_call.1} parent=47 // pred_check_branch
        %361 = sbr.rel (%p359) target = $region52
      $region51: #{tpu_custom_call.1} parent=47 // pred_region
        %p362 = scmp.lt.s32.totalorder %s18, 1
        %s363 = scalar_select %p362, %s18, 1
        %s364 = smul.addr %s363, 8
        %s365 = scalar_lea.vmem %s0, %s364
      $region52: #{tpu_custom_call.1} parent=47 // pred_fallthru
        _
      // Predicated region
      $region53: #{tpu_custom_call.1} parent=47 // pred_check
        %p366 = pneg %p64
      $region54: #{tpu_custom_call.1} parent=47 // pred_check_branch
        %368 = sbr.rel (%p366) target = $region56
      $region55: #{tpu_custom_call.1} parent=47 // pred_region
        %p369 = scmp.lt.s32.totalorder %s18, 1
        %s370 = scalar_select %p369, %s18, 1
        %s371 = smul.addr %s370, 8
        %s372 = scalar_lea.vmem %s1, %s371
      $region56: #{tpu_custom_call.1} parent=47 // pred_fallthru
        _
      // Predicated region
      $region57: #{tpu_custom_call.1} parent=47 // pred_check
        %p373 = pneg %p90
      $region58: #{tpu_custom_call.1} parent=47 // pred_check_branch
        %375 = sbr.rel (%p373) target = $region60
      $region59: #{tpu_custom_call.1} parent=47 // pred_region
        %p376 = scmp.lt.s32.totalorder %s18, 1
        %s377 = scalar_select %p376, %s18, 1
        %s378 = smul.addr %s377, 8
        %s379 = scalar_lea.vmem %s2, %s378
      $region60: #{tpu_custom_call.1} parent=47 // pred_fallthru
        _
      // Predicated region
      $region61: #{tpu_custom_call.1} parent=47 // pred_check
        %p380 = pneg %p116
      $region62: #{tpu_custom_call.1} parent=47 // pred_check_branch
        %382 = sbr.rel (%p380) target = $region64
      $region63: #{tpu_custom_call.1} parent=47 // pred_region
        %p383 = scmp.lt.s32.totalorder %s18, 1
        %s384 = scalar_select %p383, %s18, 1
        %s385 = smul.addr %s384, 2
        %s386 = smul.addr %s385, 8
        %s387 = scalar_lea.vmem %s3, %s386
      $region64: #{tpu_custom_call.1} parent=47 // pred_fallthru
        _
    $region48: #{tpu_custom_call.1} parent=5 // pred_fallthru
      _
    %p388 = scmp.le.s32.totalorder 1, %s18
    %p389 = scmp.lt.s32.totalorder %s18, 3
    %p390 = pnand %p388, %p389
    %p391 = pneg %p390
    // Predicated region
    $region65: #{tpu_custom_call.1} parent=5 // pred_check
      _
    $region66: #{tpu_custom_call.1} parent=5 // pred_check_branch
      %393 = sbr.rel (%p390) target = $region68
    $region67: #{tpu_custom_call.1} parent=5 // pred_region
      %s394 = ssub.s32 %s18, 1
      %p395 = scmp.lt.s32.totalorder %s23, 1
      %s396 = scalar_select %p395, %s23, 1
      %s397 = smul.addr %s396, 8
      %s398 = scalar_lea.vmem %s0, %s397
      %p399 = pneg %p44
      %p400 = pneg %p41
      %p401 = scmp.lt.s32.totalorder %s23, 1
      %s402 = scalar_select %p401, %s23, 1
      %s403 = smul.addr %s402, 8
      %s404 = scalar_lea.vmem %s1, %s403
      %p405 = pneg %p70
      %p406 = pneg %p67
      %p407 = scmp.lt.s32.totalorder %s23, 1
      %s408 = scalar_select %p407, %s23, 1
      %s409 = smul.addr %s408, 8
      %s410 = scalar_lea.vmem %s2, %s409
      %p411 = pneg %p96
      %p412 = pneg %p93
      %p413 = scmp.lt.s32.totalorder %s23, 1
      %s414 = scalar_select %p413, %s23, 1
      %s415 = smul.addr %s414, 2
      %s416 = smul.addr %s415, 8
      %s417 = scalar_lea.vmem %s3, %s416
      %p418 = pneg %p122
      %p419 = pneg %p119
      %p420 = pneg %p143
      %p421 = pneg %p140
      %p422 = pneg %p164
      %p423 = pneg %p161
      %p424 = pneg %p185
      %p425 = pneg %p182
      %p426 = pneg %p206
      %p427 = pneg %p203
      %p428 = pneg %p227
      %p429 = pneg %p224
      %p430 = pneg %p248
      %p431 = pneg %p245
      %p432 = pneg %p269
      %p433 = pneg %p266
      %p434 = pneg %p290
      %p435 = pneg %p287
      %p436 = pneg %p316
      %p437 = pneg %p313
      %p438 = scmp.lt.s32.totalorder %s23, 1
      %s439 = scalar_select %p438, %s23, 1
      %s440 = scalar_lea.vmem %s12, %s439
      %p441 = scmp.lt.s32.totalorder %s23, 1
      %s442 = scalar_select %p441, %s23, 1
      %s443 = smul.addr %s442, 8
      %s444 = scalar_lea.vmem %s0, %s443
      %p445 = scmp.lt.s32.totalorder %s23, 1
      %s446 = scalar_select %p445, %s23, 1
      %s447 = smul.addr %s446, 8
      %s448 = scalar_lea.vmem %s1, %s447
      %p449 = scmp.lt.s32.totalorder %s23, 1
      %s450 = scalar_select %p449, %s23, 1
      %s451 = smul.addr %s450, 8
      %s452 = scalar_lea.vmem %s2, %s451
      %p453 = scmp.lt.s32.totalorder %s23, 1
      %s454 = scalar_select %p453, %s23, 1
      %s455 = smul.addr %s454, 2
      %s456 = smul.addr %s455, 8
      %s457 = scalar_lea.vmem %s3, %s456
      %p458 = scmp.lt.s32.totalorder %s23, 1
      %s459 = scalar_select %p458, %s23, 1
      %s460 = scalar_lea.vmem %s12, %s459
      %v461 = vld [vmem:[%s444] sm:$0xff]
      %v462 = vld [vmem:[%s448] sm:$0xff]
      %v463 = vld [vmem:[%s452] sm:$0xff]
      %v464 = vld [vmem:[%s457] sm:$0xff]
      %v465 = vld [vmem:[%s457 + $0x8] sm:$0xff]
      %vm466 = vcmask 64512
      %v468 = vsel %vm466, %v461, 0
      %470 = vmatprep.subr.mxu0 0.0
      %471 = vmatpush1.msra.mxu0 %v463
      %472 = vmatprep.subr.mxu0 0.0
      %473 = vmatpush1.msra.mxu0 0.0
      %474 = vmatprep.subr.mxu0 0.0
      %475 = vmatpush1.msra.mxu0 0.0
      %476 = vmatprep.subr.mxu0 0.0
      %477 = vmatpush1.msra.mxu0 0.0
      %478 = vmatprep.subr.mxu0 0.0
      %479 = vmatpush1.msra.mxu0 0.0
      %480 = vmatprep.subr.mxu0 0.0
      %481 = vmatpush1.msra.mxu0 0.0
      %482 = vmatprep.subr.mxu0 0.0
      %483 = vmatpush1.msra.mxu0 0.0
      %484 = vmatprep.subr.mxu0 0.0
      %485 = vmatpush1.msra.mxu0 0.0
      %486 = vmatprep.subr.mxu0 0.0
      %487 = vmatpush1.msra.mxu0 0.0
      %488 = vmatprep.subr.mxu0 0.0
      %489 = vmatpush1.msra.mxu0 0.0
      %490 = vmatprep.subr.mxu0 0.0
      %491 = vmatpush1.msra.mxu0 0.0
      %492 = vmatprep.subr.mxu0 0.0
      %493 = vmatpush1.msra.mxu0 0.0
      %494 = vmatprep.subr.mxu0 0.0
      %495 = vmatpush1.msra.mxu0 0.0
      %496 = vmatprep.subr.mxu0 0.0
      %497 = vmatpush1.msra.mxu0 0.0
      %498 = vmatprep.subr.mxu0 0.0
      %499 = vmatpush1.msra.mxu0 0.0
      %500 = vmatprep.subr.mxu0 0.0
      %501 = vmatpush1.msra.mxu0 0.0
      %502 = vmatprep.subr.mxu0 0.0
      %503 = vmatpush1.msra.mxu0 0.0
      %504 = vmatprep.subr.mxu0 0.0
      %505 = vmatpush1.msra.mxu0 0.0
      %506 = vmatprep.subr.mxu0 0.0
      %507 = vmatpush1.msra.mxu0 0.0
      %508 = vmatprep.subr.mxu0 0.0
      %509 = vmatpush1.msra.mxu0 0.0
      %510 = vmatprep.subr.mxu0 0.0
      %511 = vmatpush1.msra.mxu0 0.0
      %512 = vmatprep.subr.mxu0 0.0
      %513 = vmatpush1.msra.mxu0 0.0
      %514 = vmatprep.subr.mxu0 0.0
      %515 = vmatpush1.msra.mxu0 0.0
      %516 = vmatprep.subr.mxu0 0.0
      %517 = vmatpush1.msra.mxu0 0.0
      %518 = vmatprep.subr.mxu0 0.0
      %519 = vmatpush1.msra.mxu0 0.0
      %520 = vmatprep.subr.mxu0 0.0
      %521 = vmatpush1.msra.mxu0 0.0
      %522 = vmatprep.subr.mxu0 0.0
      %523 = vmatpush1.msra.mxu0 0.0
      %524 = vmatprep.subr.mxu0 0.0
      %525 = vmatpush1.msra.mxu0 0.0
      %526 = vmatprep.subr.mxu0 0.0
      %527 = vmatpush1.msra.mxu0 0.0
      %528 = vmatprep.subr.mxu0 0.0
      %529 = vmatpush1.msra.mxu0 0.0
      %530 = vmatprep.subr.mxu0 0.0
      %531 = vmatpush1.msra.mxu0 0.0
      %532 = vmatprep.subr.mxu0 0.0
      %533 = vmatpush1.msra.mxu0 0.0
      %534 = vmatprep.mubr.f32.mxu0 0.0
      %535 = vmatmul.mubr.f32.gmra.mrb[0].mxu0 %v468
      %v536 = vpop.f32.mrb[0].mxu0
      %v537 = vadd.f32 0.0, %v536
      %v538 = vpop.f32.mrb[0].mxu0
      %539 = vdwg.mxu0
      %vm540 = vcmask 130048
      %v542 = vsel %vm540, %v462, 0
      %544 = vmatprep.subr.mxu0 0.0
      %545 = vmatpush1.msra.mxu0 %v464
      %546 = vmatprep.subr.mxu0 0.0
      %547 = vmatpush1.msra.mxu0 %v465
      %548 = vmatprep.subr.mxu0 0.0
      %549 = vmatpush1.msra.mxu0 0.0
      %550 = vmatprep.subr.mxu0 0.0
      %551 = vmatpush1.msra.mxu0 0.0
      %552 = vmatprep.subr.mxu0 0.0
      %553 = vmatpush1.msra.mxu0 0.0
      %554 = vmatprep.subr.mxu0 0.0
      %555 = vmatpush1.msra.mxu0 0.0
      %556 = vmatprep.subr.mxu0 0.0
      %557 = vmatpush1.msra.mxu0 0.0
      %558 = vmatprep.subr.mxu0 0.0
      %559 = vmatpush1.msra.mxu0 0.0
      %560 = vmatprep.subr.mxu0 0.0
      %561 = vmatpush1.msra.mxu0 0.0
      %562 = vmatprep.subr.mxu0 0.0
      %563 = vmatpush1.msra.mxu0 0.0
      %564 = vmatprep.subr.mxu0 0.0
      %565 = vmatpush1.msra.mxu0 0.0
      %566 = vmatprep.subr.mxu0 0.0
      %567 = vmatpush1.msra.mxu0 0.0
      %568 = vmatprep.subr.mxu0 0.0
      %569 = vmatpush1.msra.mxu0 0.0
      %570 = vmatprep.subr.mxu0 0.0
      %571 = vmatpush1.msra.mxu0 0.0
      %572 = vmatprep.subr.mxu0 0.0
      %573 = vmatpush1.msra.mxu0 0.0
      %574 = vmatprep.subr.mxu0 0.0
      %575 = vmatpush1.msra.mxu0 0.0
      %576 = vmatprep.subr.mxu0 0.0
      %577 = vmatpush1.msra.mxu0 0.0
      %578 = vmatprep.subr.mxu0 0.0
      %579 = vmatpush1.msra.mxu0 0.0
      %580 = vmatprep.subr.mxu0 0.0
      %581 = vmatpush1.msra.mxu0 0.0
      %582 = vmatprep.subr.mxu0 0.0
      %583 = vmatpush1.msra.mxu0 0.0
      %584 = vmatprep.subr.mxu0 0.0
      %585 = vmatpush1.msra.mxu0 0.0
      %586 = vmatprep.subr.mxu0 0.0
      %587 = vmatpush1.msra.mxu0 0.0
      %588 = vmatprep.subr.mxu0 0.0
      %589 = vmatpush1.msra.mxu0 0.0
      %590 = vmatprep.subr.mxu0 0.0
      %591 = vmatpush1.msra.mxu0 0.0
      %592 = vmatprep.subr.mxu0 0.0
      %593 = vmatpush1.msra.mxu0 0.0
      %594 = vmatprep.subr.mxu0 0.0
      %595 = vmatpush1.msra.mxu0 0.0
      %596 = vmatprep.subr.mxu0 0.0
      %597 = vmatpush1.msra.mxu0 0.0
      %598 = vmatprep.subr.mxu0 0.0
      %599 = vmatpush1.msra.mxu0 0.0
      %600 = vmatprep.subr.mxu0 0.0
      %601 = vmatpush1.msra.mxu0 0.0
      %602 = vmatprep.subr.mxu0 0.0
      %603 = vmatpush1.msra.mxu0 0.0
      %604 = vmatprep.subr.mxu0 0.0
      %605 = vmatpush1.msra.mxu0 0.0
      %606 = vmatprep.subr.mxu0 0.0
      %607 = vmatpush1.msra.mxu0 0.0
      %608 = vmatprep.mubr.f32.mxu0 0.0
      %609 = vmatmul.mubr.f32.gmra.mrb[0].mxu0 %v542
      %v610 = vpop.f32.mrb[0].mxu0
      %v611 = vadd.f32 0.0, %v610
      %v612 = vpop.f32.mrb[0].mxu0
      %613 = vdwg.mxu0
      %v614 = vld [vmem:[%s4] sm:$0xf]
      %vm615 = vcmask 31744
      %v617 = vsel %vm615, %v537, 0
      %vm619 = vcmask 1043456
      %v621 = vsel %vm619, %v614, 0
      %623 = vmatprep.subr.mxu0 0.0
      %624 = vmatpush1.msra.mxu0 %v621
      %625 = vmatprep.subr.mxu0 0.0
      %626 = vmatpush1.msra.mxu0 0.0
      %627 = vmatprep.subr.mxu0 0.0
      %628 = vmatpush1.msra.mxu0 0.0
      %629 = vmatprep.subr.mxu0 0.0
      %630 = vmatpush1.msra.mxu0 0.0
      %631 = vmatprep.subr.mxu0 0.0
      %632 = vmatpush1.msra.mxu0 0.0
      %633 = vmatprep.subr.mxu0 0.0
      %634 = vmatpush1.msra.mxu0 0.0
      %635 = vmatprep.subr.mxu0 0.0
      %636 = vmatpush1.msra.mxu0 0.0
      %637 = vmatprep.subr.mxu0 0.0
      %638 = vmatpush1.msra.mxu0 0.0
      %639 = vmatprep.subr.mxu0 0.0
      %640 = vmatpush1.msra.mxu0 0.0
      %641 = vmatprep.subr.mxu0 0.0
      %642 = vmatpush1.msra.mxu0 0.0
      %643 = vmatprep.subr.mxu0 0.0
      %644 = vmatpush1.msra.mxu0 0.0
      %645 = vmatprep.subr.mxu0 0.0
      %646 = vmatpush1.msra.mxu0 0.0
      %647 = vmatprep.subr.mxu0 0.0
      %648 = vmatpush1.msra.mxu0 0.0
      %649 = vmatprep.subr.mxu0 0.0
      %650 = vmatpush1.msra.mxu0 0.0
      %651 = vmatprep.subr.mxu0 0.0
      %652 = vmatpush1.msra.mxu0 0.0
      %653 = vmatprep.subr.mxu0 0.0
      %654 = vmatpush1.msra.mxu0 0.0
      %655 = vmatprep.subr.mxu0 0.0
      %656 = vmatpush1.msra.mxu0 0.0
      %657 = vmatprep.subr.mxu0 0.0
      %658 = vmatpush1.msra.mxu0 0.0
      %659 = vmatprep.subr.mxu0 0.0
      %660 = vmatpush1.msra.mxu0 0.0
      %661 = vmatprep.subr.mxu0 0.0
      %662 = vmatpush1.msra.mxu0 0.0
      %663 = vmatprep.subr.mxu0 0.0
      %664 = vmatpush1.msra.mxu0 0.0
      %665 = vmatprep.subr.mxu0 0.0
      %666 = vmatpush1.msra.mxu0 0.0
      %667 = vmatprep.subr.mxu0 0.0
      %668 = vmatpush1.msra.mxu0 0.0
      %669 = vmatprep.subr.mxu0 0.0
      %670 = vmatpush1.msra.mxu0 0.0
      %671 = vmatprep.subr.mxu0 0.0
      %672 = vmatpush1.msra.mxu0 0.0
      %673 = vmatprep.subr.mxu0 0.0
      %674 = vmatpush1.msra.mxu0 0.0
      %675 = vmatprep.subr.mxu0 0.0
      %676 = vmatpush1.msra.mxu0 0.0
      %677 = vmatprep.subr.mxu0 0.0
      %678 = vmatpush1.msra.mxu0 0.0
      %679 = vmatprep.subr.mxu0 0.0
      %680 = vmatpush1.msra.mxu0 0.0
      %681 = vmatprep.subr.mxu0 0.0
      %682 = vmatpush1.msra.mxu0 0.0
      %683 = vmatprep.subr.mxu0 0.0
      %684 = vmatpush1.msra.mxu0 0.0
      %685 = vmatprep.subr.mxu0 0.0
      %686 = vmatpush1.msra.mxu0 0.0
      %687 = vmatprep.mubr.f32.mxu0 0.0
      %688 = vmatmul.mubr.f32.gmra.mrb[0].mxu0 %v617
      %v689 = vpop.f32.mrb[0].mxu0
      %v690 = vadd.f32 0.0, %v689
      %v691 = vpop.f32.mrb[0].mxu0
      %692 = vdwg.mxu0
      %v693 = vld [vmem:[%s5] sm:$0x1]
      %695 = vset.pattern.permute.xlu0 0
      %696 = vperm.xlu0 %695, %v611
      %v697 = vpop.permute.xlu0 %696
      %v700 = vlaneseq
      %v701 = vshrl.u32 %v700, 7
      %v702 = vsub.s32 0, %v701
      %v703 = vrot.slane %v693, %v702
      %v705 = vmul.f32 %v697, %v703
      %v706 = vadd.f32 %v690, %v705
      %v707 = vld [vmem:[%s6] sm:$0x1]
      %v709 = vlaneseq
      %v710 = vshrl.u32 %v709, 7
      %v711 = vsub.s32 0, %v710
      %v712 = vrot.slane %v707, %v711
      %v714 = vadd.f32 %v706, %v712
      %v715 = vmax.f32 %v714, 0.0
      %716 = vxpose.xlu0.b32.start [1/16] %v462, 128
      %717 = vxpose.xlu0.b32.cont [2/16] 0.0, 128
      %718 = vxpose.xlu0.b32.cont [3/16] 0.0, 128
      %719 = vxpose.xlu0.b32.cont [4/16] 0.0, 128
      %720 = vxpose.xlu0.b32.cont [5/16] 0.0, 128
      %721 = vxpose.xlu0.b32.cont [6/16] 0.0, 128
      %722 = vxpose.xlu0.b32.cont [7/16] 0.0, 128
      %723 = vxpose.xlu0.b32.cont [8/16] 0.0, 128
      %724 = vxpose.xlu0.b32.cont [9/16] 0.0, 128
      %725 = vxpose.xlu0.b32.cont [10/16] 0.0, 128
      %726 = vxpose.xlu0.b32.cont [11/16] 0.0, 128
      %727 = vxpose.xlu0.b32.cont [12/16] 0.0, 128
      %728 = vxpose.xlu0.b32.cont [13/16] 0.0, 128
      %729 = vxpose.xlu0.b32.cont [14/16] 0.0, 128
      %730 = vxpose.xlu0.b32.cont [15/16] 0.0, 128
      %731 = vxpose.xlu0.b32.end [16/16] 0.0, 128
      %v732 = vpop.trf.xlu0
      %v733 = vpop.trf.xlu0
      %v734 = vpop.trf.xlu0
      %v735 = vpop.trf.xlu0
      %v736 = vpop.trf.xlu0
      %v737 = vpop.trf.xlu0
      %v738 = vpop.trf.xlu0
      %v739 = vpop.trf.xlu0
      %v740 = vpop.trf.xlu0
      %v741 = vpop.trf.xlu0
      %v742 = vpop.trf.xlu0
      %v743 = vpop.trf.xlu0
      %v744 = vpop.trf.xlu0
      %v745 = vpop.trf.xlu0
      %v746 = vpop.trf.xlu0
      %v747 = vpop.trf.xlu0
      %v749 = vsel %vm466, %v732, 0
      %v752 = vsel %vm466, %v733, 0
      %754 = vmatprep.subr.mxu0 0.0
      %755 = vmatpush1.msra.mxu0 %v463
      %756 = vmatprep.subr.mxu0 0.0
      %757 = vmatpush1.msra.mxu0 0.0
      %758 = vmatprep.subr.mxu0 0.0
      %759 = vmatpush1.msra.mxu0 0.0
      %760 = vmatprep.subr.mxu0 0.0
      %761 = vmatpush1.msra.mxu0 0.0
      %762 = vmatprep.subr.mxu0 0.0
      %763 = vmatpush1.msra.mxu0 0.0
      %764 = vmatprep.subr.mxu0 0.0
      %765 = vmatpush1.msra.mxu0 0.0
      %766 = vmatprep.subr.mxu0 0.0
      %767 = vmatpush1.msra.mxu0 0.0
      %768 = vmatprep.subr.mxu0 0.0
      %769 = vmatpush1.msra.mxu0 0.0
      %770 = vmatprep.subr.mxu0 0.0
      %771 = vmatpush1.msra.mxu0 0.0
      %772 = vmatprep.subr.mxu0 0.0
      %773 = vmatpush1.msra.mxu0 0.0
      %774 = vmatprep.subr.mxu0 0.0
      %775 = vmatpush1.msra.mxu0 0.0
      %776 = vmatprep.subr.mxu0 0.0
      %777 = vmatpush1.msra.mxu0 0.0
      %778 = vmatprep.subr.mxu0 0.0
      %779 = vmatpush1.msra.mxu0 0.0
      %780 = vmatprep.subr.mxu0 0.0
      %781 = vmatpush1.msra.mxu0 0.0
      %782 = vmatprep.subr.mxu0 0.0
      %783 = vmatpush1.msra.mxu0 0.0
      %784 = vmatprep.subr.mxu0 0.0
      %785 = vmatpush1.msra.mxu0 0.0
      %786 = vmatprep.subr.mxu0 0.0
      %787 = vmatpush1.msra.mxu0 0.0
      %788 = vmatprep.subr.mxu0 0.0
      %789 = vmatpush1.msra.mxu0 0.0
      %790 = vmatprep.subr.mxu0 0.0
      %791 = vmatpush1.msra.mxu0 0.0
      %792 = vmatprep.subr.mxu0 0.0
      %793 = vmatpush1.msra.mxu0 0.0
      %794 = vmatprep.subr.mxu0 0.0
      %795 = vmatpush1.msra.mxu0 0.0
      %796 = vmatprep.subr.mxu0 0.0
      %797 = vmatpush1.msra.mxu0 0.0
      %798 = vmatprep.subr.mxu0 0.0
      %799 = vmatpush1.msra.mxu0 0.0
      %800 = vmatprep.subr.mxu0 0.0
      %801 = vmatpush1.msra.mxu0 0.0
      %802 = vmatprep.subr.mxu0 0.0
      %803 = vmatpush1.msra.mxu0 0.0
      %804 = vmatprep.subr.mxu0 0.0
      %805 = vmatpush1.msra.mxu0 0.0
      %806 = vmatprep.subr.mxu0 0.0
      %807 = vmatpush1.msra.mxu0 0.0
      %808 = vmatprep.subr.mxu0 0.0
      %809 = vmatpush1.msra.mxu0 0.0
      %810 = vmatprep.subr.mxu0 0.0
      %811 = vmatpush1.msra.mxu0 0.0
      %812 = vmatprep.subr.mxu0 0.0
      %813 = vmatpush1.msra.mxu0 0.0
      %814 = vmatprep.subr.mxu0 0.0
      %815 = vmatpush1.msra.mxu0 0.0
      %816 = vmatprep.subr.mxu0 0.0
      %817 = vmatpush1.msra.mxu0 0.0
      %818 = vmatprep.mubr.f32.mxu0 0.0
      %819 = vmatmul.mubr.f32.gmra.mrb[0].mxu0 %v749
      %v820 = vpop.f32.mrb[0].mxu0
      %v821 = vadd.f32 0.0, %v820
      %v822 = vpop.f32.mrb[0].mxu0
      %823 = vmatprep.mubr.f32.mxu0 0.0
      %824 = vmatmul.mubr.f32.gmra.mrb[0].mxu0 %v752
      %v825 = vpop.f32.mrb[0].mxu0
      %v826 = vadd.f32 0.0, %v825
      %v827 = vpop.f32.mrb[0].mxu0
      %828 = vdwg.mxu0
      %v829 = vld [vmem:[%s7] sm:$0xf]
      %v831 = vsel %vm615, %v821, 0
      %v834 = vsel %vm615, %v826, 0
      %v837 = vsel %vm619, %v829, 0
      %839 = vmatprep.subr.mxu0 0.0
      %840 = vmatpush1.msra.mxu0 %v837
      %841 = vmatprep.subr.mxu0 0.0
      %842 = vmatpush1.msra.mxu0 0.0
      %843 = vmatprep.subr.mxu0 0.0
      %844 = vmatpush1.msra.mxu0 0.0
      %845 = vmatprep.subr.mxu0 0.0
      %846 = vmatpush1.msra.mxu0 0.0
      %847 = vmatprep.subr.mxu0 0.0
      %848 = vmatpush1.msra.mxu0 0.0
      %849 = vmatprep.subr.mxu0 0.0
      %850 = vmatpush1.msra.mxu0 0.0
      %851 = vmatprep.subr.mxu0 0.0
      %852 = vmatpush1.msra.mxu0 0.0
      %853 = vmatprep.subr.mxu0 0.0
      %854 = vmatpush1.msra.mxu0 0.0
      %855 = vmatprep.subr.mxu0 0.0
      %856 = vmatpush1.msra.mxu0 0.0
      %857 = vmatprep.subr.mxu0 0.0
      %858 = vmatpush1.msra.mxu0 0.0
      %859 = vmatprep.subr.mxu0 0.0
      %860 = vmatpush1.msra.mxu0 0.0
      %861 = vmatprep.subr.mxu0 0.0
      %862 = vmatpush1.msra.mxu0 0.0
      %863 = vmatprep.subr.mxu0 0.0
      %864 = vmatpush1.msra.mxu0 0.0
      %865 = vmatprep.subr.mxu0 0.0
      %866 = vmatpush1.msra.mxu0 0.0
      %867 = vmatprep.subr.mxu0 0.0
      %868 = vmatpush1.msra.mxu0 0.0
      %869 = vmatprep.subr.mxu0 0.0
      %870 = vmatpush1.msra.mxu0 0.0
      %871 = vmatprep.subr.mxu0 0.0
      %872 = vmatpush1.msra.mxu0 0.0
      %873 = vmatprep.subr.mxu0 0.0
      %874 = vmatpush1.msra.mxu0 0.0
      %875 = vmatprep.subr.mxu0 0.0
      %876 = vmatpush1.msra.mxu0 0.0
      %877 = vmatprep.subr.mxu0 0.0
      %878 = vmatpush1.msra.mxu0 0.0
      %879 = vmatprep.subr.mxu0 0.0
      %880 = vmatpush1.msra.mxu0 0.0
      %881 = vmatprep.subr.mxu0 0.0
      %882 = vmatpush1.msra.mxu0 0.0
      %883 = vmatprep.subr.mxu0 0.0
      %884 = vmatpush1.msra.mxu0 0.0
      %885 = vmatprep.subr.mxu0 0.0
      %886 = vmatpush1.msra.mxu0 0.0
      %887 = vmatprep.subr.mxu0 0.0
      %888 = vmatpush1.msra.mxu0 0.0
      %889 = vmatprep.subr.mxu0 0.0
      %890 = vmatpush1.msra.mxu0 0.0
      %891 = vmatprep.subr.mxu0 0.0
      %892 = vmatpush1.msra.mxu0 0.0
      %893 = vmatprep.subr.mxu0 0.0
      %894 = vmatpush1.msra.mxu0 0.0
      %895 = vmatprep.subr.mxu0 0.0
      %896 = vmatpush1.msra.mxu0 0.0
      %897 = vmatprep.subr.mxu0 0.0
      %898 = vmatpush1.msra.mxu0 0.0
      %899 = vmatprep.subr.mxu0 0.0
      %900 = vmatpush1.msra.mxu0 0.0
      %901 = vmatprep.subr.mxu0 0.0
      %902 = vmatpush1.msra.mxu0 0.0
      %903 = vmatprep.mubr.f32.mxu0 0.0
      %904 = vmatmul.mubr.f32.gmra.mrb[0].mxu0 %v831
      %v905 = vpop.f32.mrb[0].mxu0
      %v906 = vadd.f32 0.0, %v905
      %v907 = vpop.f32.mrb[0].mxu0
      %908 = vmatprep.mubr.f32.mxu0 0.0
      %909 = vmatmul.mubr.f32.gmra.mrb[0].mxu0 %v834
      %v910 = vpop.f32.mrb[0].mxu0
      %v911 = vadd.f32 0.0, %v910
      %v912 = vpop.f32.mrb[0].mxu0
      %913 = vdwg.mxu0
      %v914 = vld [vmem:[%s8] sm:$0x1]
      %916 = vset.pattern.permute.xlu0 0
      %917 = vperm.xlu0 %916, %v464
      %v918 = vpop.permute.xlu0 %917
      %921 = vset.pattern.permute.xlu0 0
      %922 = vperm.xlu0 %921, %v465
      %v923 = vpop.permute.xlu0 %922
      %v926 = vlaneseq
      %v927 = vshrl.u32 %v926, 7
      %v928 = vsub.s32 0, %v927
      %v929 = vrot.slane %v914, %v928
      %v931 = vmul.f32 %v918, %v929
      %v932 = vmul.f32 %v923, %v929
      %v933 = vadd.f32 %v906, %v931
      %v934 = vadd.f32 %v911, %v932
      %v935 = vld [vmem:[%s9] sm:$0x1]
      %v937 = vlaneseq
      %v938 = vshrl.u32 %v937, 7
      %v939 = vsub.s32 0, %v938
      %v940 = vrot.slane %v935, %v939
      %v942 = vadd.f32 %v933, %v940
      %v943 = vadd.f32 %v934, %v940
      %v944 = vmax.f32 %v942, 0.0
      %v945 = vmax.f32 %v943, 0.0
      %946 = vmatprep.subr.mxu0 0.0
      %947 = vmatpush1.msra.mxu0 %v715
      %948 = vmatprep.subr.mxu0 0.0
      %949 = vmatpush1.msra.mxu0 0.0
      %950 = vmatprep.subr.mxu0 0.0
      %951 = vmatpush1.msra.mxu0 0.0
      %952 = vmatprep.subr.mxu0 0.0
      %953 = vmatpush1.msra.mxu0 0.0
      %954 = vmatprep.subr.mxu0 0.0
      %955 = vmatpush1.msra.mxu0 0.0
      %956 = vmatprep.subr.mxu0 0.0
      %957 = vmatpush1.msra.mxu0 0.0
      %958 = vmatprep.subr.mxu0 0.0
      %959 = vmatpush1.msra.mxu0 0.0
      %960 = vmatprep.subr.mxu0 0.0
      %961 = vmatpush1.msra.mxu0 0.0
      %962 = vmatprep.subr.mxu0 0.0
      %963 = vmatpush1.msra.mxu0 0.0
      %964 = vmatprep.subr.mxu0 0.0
      %965 = vmatpush1.msra.mxu0 0.0
      %966 = vmatprep.subr.mxu0 0.0
      %967 = vmatpush1.msra.mxu0 0.0
      %968 = vmatprep.subr.mxu0 0.0
      %969 = vmatpush1.msra.mxu0 0.0
      %970 = vmatprep.subr.mxu0 0.0
      %971 = vmatpush1.msra.mxu0 0.0
      %972 = vmatprep.subr.mxu0 0.0
      %973 = vmatpush1.msra.mxu0 0.0
      %974 = vmatprep.subr.mxu0 0.0
      %975 = vmatpush1.msra.mxu0 0.0
      %976 = vmatprep.subr.mxu0 0.0
      %977 = vmatpush1.msra.mxu0 0.0
      %978 = vmatprep.subr.mxu0 0.0
      %979 = vmatpush1.msra.mxu0 0.0
      %980 = vmatprep.subr.mxu0 0.0
      %981 = vmatpush1.msra.mxu0 0.0
      %982 = vmatprep.subr.mxu0 0.0
      %983 = vmatpush1.msra.mxu0 0.0
      %984 = vmatprep.subr.mxu0 0.0
      %985 = vmatpush1.msra.mxu0 0.0
      %986 = vmatprep.subr.mxu0 0.0
      %987 = vmatpush1.msra.mxu0 0.0
      %988 = vmatprep.subr.mxu0 0.0
      %989 = vmatpush1.msra.mxu0 0.0
      %990 = vmatprep.subr.mxu0 0.0
      %991 = vmatpush1.msra.mxu0 0.0
      %992 = vmatprep.subr.mxu0 0.0
      %993 = vmatpush1.msra.mxu0 0.0
      %994 = vmatprep.subr.mxu0 0.0
      %995 = vmatpush1.msra.mxu0 0.0
      %996 = vmatprep.subr.mxu0 0.0
      %997 = vmatpush1.msra.mxu0 0.0
      %998 = vmatprep.subr.mxu0 0.0
      %999 = vmatpush1.msra.mxu0 0.0
      %1000 = vmatprep.subr.mxu0 0.0
      %1001 = vmatpush1.msra.mxu0 0.0
      %1002 = vmatprep.subr.mxu0 0.0
      %1003 = vmatpush1.msra.mxu0 0.0
      %1004 = vmatprep.subr.mxu0 0.0
      %1005 = vmatpush1.msra.mxu0 0.0
      %1006 = vmatprep.subr.mxu0 0.0
      %1007 = vmatpush1.msra.mxu0 0.0
      %1008 = vmatprep.subr.mxu0 0.0
      %1009 = vmatpush1.msra.mxu0 0.0
      %1010 = vmatprep.mubr.f32.mxu0 0.0
      %1011 = vmatmul.mubr.f32.gmra.mrb[0].mxu0 %v468
      %v1012 = vpop.f32.mrb[0].mxu0
      %v1013 = vadd.f32 0.0, %v1012
      %v1014 = vpop.f32.mrb[0].mxu0
      %1015 = vdwg.mxu0
      %1016 = vmatprep.subr.mxu0 0.0
      %1017 = vmatpush1.msra.mxu0 %v944
      %1018 = vmatprep.subr.mxu0 0.0
      %1019 = vmatpush1.msra.mxu0 %v945
      %1020 = vmatprep.subr.mxu0 0.0
      %1021 = vmatpush1.msra.mxu0 0.0
      %1022 = vmatprep.subr.mxu0 0.0
      %1023 = vmatpush1.msra.mxu0 0.0
      %1024 = vmatprep.subr.mxu0 0.0
      %1025 = vmatpush1.msra.mxu0 0.0
      %1026 = vmatprep.subr.mxu0 0.0
      %1027 = vmatpush1.msra.mxu0 0.0
      %1028 = vmatprep.subr.mxu0 0.0
      %1029 = vmatpush1.msra.mxu0 0.0
      %1030 = vmatprep.subr.mxu0 0.0
      %1031 = vmatpush1.msra.mxu0 0.0
      %1032 = vmatprep.subr.mxu0 0.0
      %1033 = vmatpush1.msra.mxu0 0.0
      %1034 = vmatprep.subr.mxu0 0.0
      %1035 = vmatpush1.msra.mxu0 0.0
      %1036 = vmatprep.subr.mxu0 0.0
      %1037 = vmatpush1.msra.mxu0 0.0
      %1038 = vmatprep.subr.mxu0 0.0
      %1039 = vmatpush1.msra.mxu0 0.0
      %1040 = vmatprep.subr.mxu0 0.0
      %1041 = vmatpush1.msra.mxu0 0.0
      %1042 = vmatprep.subr.mxu0 0.0
      %1043 = vmatpush1.msra.mxu0 0.0
      %1044 = vmatprep.subr.mxu0 0.0
      %1045 = vmatpush1.msra.mxu0 0.0
      %1046 = vmatprep.subr.mxu0 0.0
      %1047 = vmatpush1.msra.mxu0 0.0
      %1048 = vmatprep.subr.mxu0 0.0
      %1049 = vmatpush1.msra.mxu0 0.0
      %1050 = vmatprep.subr.mxu0 0.0
      %1051 = vmatpush1.msra.mxu0 0.0
      %1052 = vmatprep.subr.mxu0 0.0
      %1053 = vmatpush1.msra.mxu0 0.0
      %1054 = vmatprep.subr.mxu0 0.0
      %1055 = vmatpush1.msra.mxu0 0.0
      %1056 = vmatprep.subr.mxu0 0.0
      %1057 = vmatpush1.msra.mxu0 0.0
      %1058 = vmatprep.subr.mxu0 0.0
      %1059 = vmatpush1.msra.mxu0 0.0
      %1060 = vmatprep.subr.mxu0 0.0
      %1061 = vmatpush1.msra.mxu0 0.0
      %1062 = vmatprep.subr.mxu0 0.0
      %1063 = vmatpush1.msra.mxu0 0.0
      %1064 = vmatprep.subr.mxu0 0.0
      %1065 = vmatpush1.msra.mxu0 0.0
      %1066 = vmatprep.subr.mxu0 0.0
      %1067 = vmatpush1.msra.mxu0 0.0
      %1068 = vmatprep.subr.mxu0 0.0
      %1069 = vmatpush1.msra.mxu0 0.0
      %1070 = vmatprep.subr.mxu0 0.0
      %1071 = vmatpush1.msra.mxu0 0.0
      %1072 = vmatprep.subr.mxu0 0.0
      %1073 = vmatpush1.msra.mxu0 0.0
      %1074 = vmatprep.subr.mxu0 0.0
      %1075 = vmatpush1.msra.mxu0 0.0
      %1076 = vmatprep.subr.mxu0 0.0
      %1077 = vmatpush1.msra.mxu0 0.0
      %1078 = vmatprep.subr.mxu0 0.0
      %1079 = vmatpush1.msra.mxu0 0.0
      %1080 = vmatprep.mubr.f32.mxu0 0.0
      %1081 = vmatmul.mubr.f32.gmra.mrb[0].mxu0 %v542
      %v1082 = vpop.f32.mrb[0].mxu0
      %v1083 = vadd.f32 0.0, %v1082
      %v1084 = vpop.f32.mrb[0].mxu0
      %1085 = vdwg.mxu0
      %v1086 = vld [vmem:[%s10] sm:$0xff]
      %v1087 = vld [vmem:[%s10 + $0x8] sm:$0x3]
      %vm1088 = vcmask 80896
      %v1090 = vsel %vm1088, %v1013, 0
      %vm1092 = vcmask 1041408
      %v1094 = vsel %vm1092, %v1087, 0
      %1096 = vmatprep.subr.mxu0 0.0
      %1097 = vmatpush1.msra.mxu0 %v1086
      %1098 = vmatprep.subr.mxu0 0.0
      %1099 = vmatpush1.msra.mxu0 %v1094
      %1100 = vmatprep.subr.mxu0 0.0
      %1101 = vmatpush1.msra.mxu0 0.0
      %1102 = vmatprep.subr.mxu0 0.0
      %1103 = vmatpush1.msra.mxu0 0.0
      %1104 = vmatprep.subr.mxu0 0.0
      %1105 = vmatpush1.msra.mxu0 0.0
      %1106 = vmatprep.subr.mxu0 0.0
      %1107 = vmatpush1.msra.mxu0 0.0
      %1108 = vmatprep.subr.mxu0 0.0
      %1109 = vmatpush1.msra.mxu0 0.0
      %1110 = vmatprep.subr.mxu0 0.0
      %1111 = vmatpush1.msra.mxu0 0.0
      %1112 = vmatprep.subr.mxu0 0.0
      %1113 = vmatpush1.msra.mxu0 0.0
      %1114 = vmatprep.subr.mxu0 0.0
      %1115 = vmatpush1.msra.mxu0 0.0
      %1116 = vmatprep.subr.mxu0 0.0
      %1117 = vmatpush1.msra.mxu0 0.0
      %1118 = vmatprep.subr.mxu0 0.0
      %1119 = vmatpush1.msra.mxu0 0.0
      %1120 = vmatprep.subr.mxu0 0.0
      %1121 = vmatpush1.msra.mxu0 0.0
      %1122 = vmatprep.subr.mxu0 0.0
      %1123 = vmatpush1.msra.mxu0 0.0
      %1124 = vmatprep.subr.mxu0 0.0
      %1125 = vmatpush1.msra.mxu0 0.0
      %1126 = vmatprep.subr.mxu0 0.0
      %1127 = vmatpush1.msra.mxu0 0.0
      %1128 = vmatprep.subr.mxu0 0.0
      %1129 = vmatpush1.msra.mxu0 0.0
      %1130 = vmatprep.subr.mxu0 0.0
      %1131 = vmatpush1.msra.mxu0 0.0
      %1132 = vmatprep.subr.mxu0 0.0
      %1133 = vmatpush1.msra.mxu0 0.0
      %1134 = vmatprep.subr.mxu0 0.0
      %1135 = vmatpush1.msra.mxu0 0.0
      %1136 = vmatprep.subr.mxu0 0.0
      %1137 = vmatpush1.msra.mxu0 0.0
      %1138 = vmatprep.subr.mxu0 0.0
      %1139 = vmatpush1.msra.mxu0 0.0
      %1140 = vmatprep.subr.mxu0 0.0
      %1141 = vmatpush1.msra.mxu0 0.0
      %1142 = vmatprep.subr.mxu0 0.0
      %1143 = vmatpush1.msra.mxu0 0.0
      %1144 = vmatprep.subr.mxu0 0.0
      %1145 = vmatpush1.msra.mxu0 0.0
      %1146 = vmatprep.subr.mxu0 0.0
      %1147 = vmatpush1.msra.mxu0 0.0
      %1148 = vmatprep.subr.mxu0 0.0
      %1149 = vmatpush1.msra.mxu0 0.0
      %1150 = vmatprep.subr.mxu0 0.0
      %1151 = vmatpush1.msra.mxu0 0.0
      %1152 = vmatprep.subr.mxu0 0.0
      %1153 = vmatpush1.msra.mxu0 0.0
      %1154 = vmatprep.subr.mxu0 0.0
      %1155 = vmatpush1.msra.mxu0 0.0
      %1156 = vmatprep.subr.mxu0 0.0
      %1157 = vmatpush1.msra.mxu0 0.0
      %1158 = vmatprep.subr.mxu0 0.0
      %1159 = vmatpush1.msra.mxu0 0.0
      %1160 = vmatprep.mubr.f32.mxu0 0.0
      %1161 = vmatmul.mubr.f32.gmra.mrb[0].mxu0 %v1090
      %v1162 = vpop.f32.mrb[0].mxu0
      %v1163 = vadd.f32 0.0, %v1162
      %v1164 = vpop.f32.mrb[0].mxu0
      %1165 = vdwg.mxu0
      %v1166 = vld [vmem:[%s11] sm:$0xff]
      %v1167 = vld [vmem:[%s11 + $0x8] sm:$0x3]
      %v1169 = vsel %vm1088, %v1083, 0
      %v1172 = vsel %vm1092, %v1167, 0
      %1174 = vmatprep.subr.mxu0 0.0
      %1175 = vmatpush1.msra.mxu0 %v1166
      %1176 = vmatprep.subr.mxu0 0.0
      %1177 = vmatpush1.msra.mxu0 %v1172
      %1178 = vmatprep.subr.mxu0 0.0
      %1179 = vmatpush1.msra.mxu0 0.0
      %1180 = vmatprep.subr.mxu0 0.0
      %1181 = vmatpush1.msra.mxu0 0.0
      %1182 = vmatprep.subr.mxu0 0.0
      %1183 = vmatpush1.msra.mxu0 0.0
      %1184 = vmatprep.subr.mxu0 0.0
      %1185 = vmatpush1.msra.mxu0 0.0
      %1186 = vmatprep.subr.mxu0 0.0
      %1187 = vmatpush1.msra.mxu0 0.0
      %1188 = vmatprep.subr.mxu0 0.0
      %1189 = vmatpush1.msra.mxu0 0.0
      %1190 = vmatprep.subr.mxu0 0.0
      %1191 = vmatpush1.msra.mxu0 0.0
      %1192 = vmatprep.subr.mxu0 0.0
      %1193 = vmatpush1.msra.mxu0 0.0
      %1194 = vmatprep.subr.mxu0 0.0
      %1195 = vmatpush1.msra.mxu0 0.0
      %1196 = vmatprep.subr.mxu0 0.0
      %1197 = vmatpush1.msra.mxu0 0.0
      %1198 = vmatprep.subr.mxu0 0.0
      %1199 = vmatpush1.msra.mxu0 0.0
      %1200 = vmatprep.subr.mxu0 0.0
      %1201 = vmatpush1.msra.mxu0 0.0
      %1202 = vmatprep.subr.mxu0 0.0
      %1203 = vmatpush1.msra.mxu0 0.0
      %1204 = vmatprep.subr.mxu0 0.0
      %1205 = vmatpush1.msra.mxu0 0.0
      %1206 = vmatprep.subr.mxu0 0.0
      %1207 = vmatpush1.msra.mxu0 0.0
      %1208 = vmatprep.subr.mxu0 0.0
      %1209 = vmatpush1.msra.mxu0 0.0
      %1210 = vmatprep.subr.mxu0 0.0
      %1211 = vmatpush1.msra.mxu0 0.0
      %1212 = vmatprep.subr.mxu0 0.0
      %1213 = vmatpush1.msra.mxu0 0.0
      %1214 = vmatprep.subr.mxu0 0.0
      %1215 = vmatpush1.msra.mxu0 0.0
      %1216 = vmatprep.subr.mxu0 0.0
      %1217 = vmatpush1.msra.mxu0 0.0
      %1218 = vmatprep.subr.mxu0 0.0
      %1219 = vmatpush1.msra.mxu0 0.0
      %1220 = vmatprep.subr.mxu0 0.0
      %1221 = vmatpush1.msra.mxu0 0.0
      %1222 = vmatprep.subr.mxu0 0.0
      %1223 = vmatpush1.msra.mxu0 0.0
      %1224 = vmatprep.subr.mxu0 0.0
      %1225 = vmatpush1.msra.mxu0 0.0
      %1226 = vmatprep.subr.mxu0 0.0
      %1227 = vmatpush1.msra.mxu0 0.0
      %1228 = vmatprep.subr.mxu0 0.0
      %1229 = vmatpush1.msra.mxu0 0.0
      %1230 = vmatprep.subr.mxu0 0.0
      %1231 = vmatpush1.msra.mxu0 0.0
      %1232 = vmatprep.subr.mxu0 0.0
      %1233 = vmatpush1.msra.mxu0 0.0
      %1234 = vmatprep.subr.mxu0 0.0
      %1235 = vmatpush1.msra.mxu0 0.0
      %1236 = vmatprep.subr.mxu0 0.0
      %1237 = vmatpush1.msra.mxu0 0.0
      %1238 = vmatprep.mubr.f32.mxu0 0.0
      %1239 = vmatmul.mubr.f32.gmra.mrb[0].mxu0 %v1169
      %v1240 = vpop.f32.mrb[0].mxu0
      %v1241 = vadd.f32 0.0, %v1240
      %v1242 = vpop.f32.mrb[0].mxu0
      %1243 = vdwg.mxu0
      %v1244 = vadd.f32 %v1163, %v1241
      %vm1245 = vcmask 15360
      %v1246 = vsel %vm1245, %v1244, 0.0
      %1247 = vadd.xlane.f32.xlu0 %v1246
      %v1248 = vpop.xlane.xlu0 %1247
      %v1249 = vrot.slane %v1248, 4
      %v1250 = vadd.f32 %v1248, %v1249
      %v1251 = vrot.slane %v1250, 2
      %v1252 = vadd.f32 %v1250, %v1251
      %v1253 = vrot.slane %v1252, 1
      %v1254 = vadd.f32 %v1252, %v1253
      %s1255 = vtos %v1254
      %v1256 = vstv %s1255
      %vm1257 = vcmask 0
      %1258 = vst.msk [vmem:[%s460] sm:$0x1] %vm1257, %v1256
      %p1259 = scmp.lt.s32.totalorder %s23, 1
      %s1260 = scalar_select %p1259, %s23, 1
      %s1261 = scalar_lea.vmem %s12, %s1260
      // Predicated region
      $region69: #{tpu_custom_call.1} parent=67 // pred_check
        %p1262 = pneg %p313
      $region70: #{tpu_custom_call.1} parent=67 // pred_check_branch
        %1264 = sbr.rel (%p1262) target = $region72
      $region71: #{tpu_custom_call.1} parent=67 // pred_region
        _
      $region72: #{tpu_custom_call.1} parent=67 // pred_fallthru
        _
    $region68: #{tpu_custom_call.1} parent=5 // pred_fallthru
      _
    %p1265 = scmp.le.s32.totalorder 2, %s18
    // Predicated region
    $region73: #{tpu_custom_call.1} parent=5 // pred_check
      %p1266 = pneg %p1265
    $region74: #{tpu_custom_call.1} parent=5 // pred_check_branch
      %1268 = sbr.rel (%p1266) target = $region76
    $region75: #{tpu_custom_call.1} parent=5 // pred_region
      %s1269 = ssub.s32 %s18, 2
      // Predicated region
      $region77: #{tpu_custom_call.1} parent=75 // pred_check
        %p1270 = pneg %p319
      $region78: #{tpu_custom_call.1} parent=75 // pred_check_branch
        %1272 = sbr.rel (%p1270) target = $region80
      $region79: #{tpu_custom_call.1} parent=75 // pred_region
        %p1273 = scmp.lt.s32.totalorder %s24, 1
        %s1274 = scalar_select %p1273, %s24, 1
        %s1275 = scalar_lea.vmem %s12, %s1274
      $region80: #{tpu_custom_call.1} parent=75 // pred_fallthru
        _
    $region76: #{tpu_custom_call.1} parent=5 // pred_fallthru
      _
  $region6: #{tpu_custom_call.1} parent=0 // loop_footer
    %s22 = sadd.s32 1, %s18
  $region7: #{tpu_custom_call.1} parent=0 // loop_footer_branch
    %17 = sbr.rel target = $region3
  $region8: #{tpu_custom_call.1} parent=0 // loop_exit
    _

</llo_original>
